<compile_context>
chip_gen: v6e
topology: v6e:2x2x1
jax: 0.10.0
libtpu: 0.0.40
codegen_flags: <defaults>
</compile_context>

<pallas_src>
import math
import numpy as np
import jax
import jax.numpy as jnp
from jax import lax
from jax.experimental import pallas as pl
from jax.experimental.pallas import tpu as pltpu

# ---------------- small config consistent with the module ----------------
B = 2                    # batch
C = 4                    # in_c
L = 64                   # img_size (1-D signal length, H == 1)
P = 8                    # patch_size
N = L // P               # num_patches = 8
D = 32                   # embed_dim
H = 4                    # num_heads
HD = D // H              # head_dim = 8
DEPTH = 2
MLP_HID = int(D * 4.0)   # mlp_ratio = 4.0 -> 128
EPS = 1e-5
SCALE = HD ** -0.5       # qk_scale = head_dim ** -0.5
M = B * N                # 16 tokens, all handled in one kernel step
NEG = -1e9               # finite masking bias (safe: diagonal block unmasked)

# ---------------- host-precomputed static masks ----------------
# Batch block-diagonal bias for the (M, H*M) score tile: query token m only
# attends to keys of its own batch element, inside every head block.
_row_b = np.arange(M) // N                           # (M,)  query batch
_col_b = np.tile(np.arange(M) // N, H)               # (H*M,) key batch per column
ATTN_BIAS = np.where(_row_b[:, None] == _col_b[None, :], 0.0, NEG).astype(np.float32)

# Head-selection mask: row-block h of the (H*M, D) tiled K/V keeps only the
# head-h feature columns.  Also serves as the "sum over my head block" matrix
# that produces the per-head softmax denominators.
HEAD_MASK = (np.arange(H * M)[:, None] // M ==
             np.arange(D)[None, :] // HD).astype(np.float32)            # (H*M, D)


# ---------------- shared math helpers (in-kernel and reference) ----------
def gelu_tanh(x):
    # TODO(synk): PyTorch nn.GELU() defaults to the exact erf formulation; the
    # tanh approximation is kept for guaranteed Mosaic lowering (max abs
    # deviation ~3e-4, well inside the test tolerance).
    c = math.sqrt(2.0 / math.pi)
    return 0.5 * x * (1.0 + jnp.tanh(c * (x + 0.044715 * x * x * x)))


def layernorm(x, w, b):
    mu = jnp.mean(x, axis=-1, keepdims=True)
    var = jnp.mean((x - mu) ** 2, axis=-1, keepdims=True)
    return (x - mu) * lax.rsqrt(var + EPS) * w + b


def get_sinusoid_encoding_table(n_position, d_hid):
    def angle_vec(pos):
        return [pos / np.power(10000, 2 * (j // 2) / d_hid) for j in range(d_hid)]
    table = np.array([angle_vec(p) for p in range(n_position)])
    table[:, 0::2] = np.sin(table[:, 0::2])
    table[:, 1::2] = np.cos(table[:, 1::2])
    return table[None].astype(np.float32)            # (1, N, D)


# ---------------- fused Pallas kernel ----------------
def vit_fused_kernel(p_ref, pw_ref, posb_ref, bias_ref, hmask_ref,
                     ln1w_ref, ln1b_ref,
                     wq_ref, bq_ref, wk_ref, bk_ref, wv_ref, bv_ref,
                     wproj_ref, bproj_ref,
                     ln2w_ref, ln2b_ref,
                     wfc1_ref, bfc1_ref, wfc2_ref, bfc2_ref,
                     o_ref):
    f32 = jnp.float32
    bf16 = jnp.bfloat16

    def dot_bf16(act_f32, w_bf16):
        # bf16 MXU operands (weights pre-cast on the host), f32 accumulation.
        return jnp.dot(act_f32.astype(bf16), w_bf16, preferred_element_type=f32)

    # ---- PatchEmbed: Conv2d(kernel==stride) as one (M, C*P) x (C*P, D) matmul.
    # posb already contains the tiled positional table + the conv bias.
    tok = dot_bf16(p_ref[...], pw_ref[...]) + posb_ref[...]              # (M, D)

    attn_bias = bias_ref[...]                                            # (M, H*M)
    hmask = hmask_ref[...]                                               # (H*M, D)
    hmask_bf = hmask.astype(bf16)                                        # hoisted

    for d in range(DEPTH):                           # static unroll over depth
        # ---- attention branch: x + proj(attn(LN1(x))) ----
        h = layernorm(tok, ln1w_ref[d], ln1b_ref[d])
        q = dot_bf16(h, wq_ref[d]) + bq_ref[d]       # (M, D); 1/sqrt(HD) folded
        k = dot_bf16(h, wk_ref[d]) + bk_ref[d]       # (M, D)
        v = dot_bf16(h, wv_ref[d]) + bv_ref[d]       # (M, D)

        # Head-block-diagonal packing: row block hh of k_tile / v_tile keeps
        # only head-hh feature columns (sublane tiling + static mask; no
        # per-head lane slicing / stacking).
        k_tile = jnp.concatenate([k] * H, axis=0) * hmask                # (H*M, D)
        v_tile = jnp.concatenate([v] * H, axis=0) * hmask                # (H*M, D)

        # All heads' scores in one (M, H*M) tile: column block hh = Q_hh K_hh^T.
        s = lax.dot_general(q.astype(bf16), k_tile.astype(bf16),
                            (((1,), (1,)), ((), ())),
                            preferred_element_type=f32)                  # (M, H*M)
        s = s + attn_bias
        # Per-row shared max: softmax is taken per head block, but a common
        # per-row shift cancels between numerator and denominator.
        s = s - jnp.max(s, axis=-1, keepdims=True)
        e = jnp.exp(s)
        e_bf = e.astype(bf16)
        o_un = jnp.dot(e_bf, v_tile.astype(bf16),
                       preferred_element_type=f32)                       # (M, D)
        denom = jnp.dot(e_bf, hmask_bf,
                        preferred_element_type=f32)                      # (M, D)
        attn = o_un * pl.reciprocal(denom, approx=True)                  # (M, D)
        tok = tok + dot_bf16(attn, wproj_ref[d]) + bproj_ref[d]

        # ---- MLP branch: x + fc2(gelu(fc1(LN2(x)))) ----
        h = layernorm(tok, ln2w_ref[d], ln2b_ref[d])
        h = dot_bf16(h, wfc1_ref[d]) + bfc1_ref[d]
        h = gelu_tanh(h)
        tok = tok + dot_bf16(h, wfc2_ref[d]) + bfc2_ref[d]

    o_ref[...] = tok


# ---------------- wrappers ----------------
def make_patches(x):
    # x: (B, C, 1, L) NCHW with H == 1.  (c, p)-order flattening matches the
    # Conv2d weight flattening over (in_c, kw).
    x = x.reshape(B, C, L)
    return x.reshape(B, C, N, P).transpose(0, 2, 1, 3).reshape(M, C * P)


def _stack(blocks, idx, dtype=None):
    a = jnp.stack([blk[idx] for blk in blocks], axis=0)
    return a.astype(dtype) if dtype is not None else a


def prepare_inputs(patches, params):
    """Constant folding + packing (traced under jit -> fused into the single
    dispatch): bf16 weights, qk scale folded into Q, conv bias folded into the
    tiled positional table, static masks."""
    bf16 = jnp.bfloat16
    blocks = params["blocks"]

    pos_bias = (jnp.tile(params["pos"].reshape(N, D), (B, 1))
                + params["patch_b"]).astype(jnp.float32)                 # (M, D)

    wqkv = _stack(blocks, 2)                                             # (DEPTH, D, 3D)
    bqkv = _stack(blocks, 3)                                             # (DEPTH, 1, 3D)
    wq = (wqkv[:, :, :D] * SCALE).astype(bf16)
    wk = wqkv[:, :, D:2 * D].astype(bf16)
    wv = wqkv[:, :, 2 * D:].astype(bf16)
    bq = bqkv[:, :, :D] * SCALE
    bk = bqkv[:, :, D:2 * D]
    bv = bqkv[:, :, 2 * D:]

    return (patches, params["patch_w"].astype(bf16), pos_bias,
            jnp.asarray(ATTN_BIAS), jnp.asarray(HEAD_MASK),
            _stack(blocks, 0), _stack(blocks, 1),                        # ln1 w, b
            wq, bq, wk, bk, wv, bv,
            _stack(blocks, 4, bf16), _stack(blocks, 5),                  # wproj, bproj
            _stack(blocks, 6), _stack(blocks, 7),                        # ln2 w, b
            _stack(blocks, 8, bf16), _stack(blocks, 9),                  # wfc1, bfc1
            _stack(blocks, 10, bf16), _stack(blocks, 11))                # wfc2, bfc2


@jax.jit
def vit_forward(x, params):
    inputs = prepare_inputs(make_patches(x), params)
    vmem_spec = pl.BlockSpec(memory_space=pltpu.MemorySpace.VMEM)
    out = pl.pallas_call(
        vit_fused_kernel,
        out_shape=jax.ShapeDtypeStruct((M, D), jnp.float32),
        in_specs=[vmem_spec] * len(inputs),
        out_specs=vmem_spec,
    )(*inputs)
    # use_mean_pooling=True -> final norm Identity; num_classes=0 -> head Identity
    return out.reshape(B, N, D)


# ---------------- pure-JAX f32 reference (same math, for validation) --------
def reference_forward(x, params):
    patches = make_patches(x)
    tok = patches @ params["patch_w"] + params["patch_b"]
    tok = tok.reshape(B, N, D) + params["pos"]
    for (ln1w, ln1b, wqkv, bqkv, wproj, bproj,
         ln2w, ln2b, wfc1, bfc1, wfc2, bfc2) in params["blocks"]:
        h = layernorm(tok, ln1w, ln1b)
        qkv = h @ wqkv + bqkv
        q = qkv[..., :D].reshape(B, N, H, HD).transpose(0, 2, 1, 3)
        k = qkv[..., D:2 * D].reshape(B, N, H, HD).transpose(0, 2, 1, 3)
        v = qkv[..., 2 * D:].reshape(B, N, H, HD).transpose(0, 2, 1, 3)
        s = jnp.einsum("bhnd,bhmd->bhnm", q, k) * SCALE
        p = jax.nn.softmax(s, axis=-1)
        o = jnp.einsum("bhnm,bhmd->bhnd", p, v).transpose(0, 2, 1, 3).reshape(B, N, D)
        tok = tok + (o @ wproj + bproj)
        h = layernorm(tok, ln2w, ln2b)
        h = gelu_tanh(h @ wfc1 + bfc1)
        tok = tok + (h @ wfc2 + bfc2)
    return tok


# ---------------- deterministic parameter init ----------------
def init_params(key):
    keys = jax.random.split(key, 2 + DEPTH)
    patch_w = jax.random.normal(keys[0], (C * P, D), jnp.float32) * 0.02
    patch_b = jax.random.normal(keys[1], (1, D), jnp.float32) * 0.02
    pos = jnp.asarray(get_sinusoid_encoding_table(N, D))                 # (1, N, D)
    blocks = []
    for i in range(DEPTH):
        ks = jax.random.split(keys[2 + i], 8)
        ln1w = jnp.ones((1, D), jnp.float32)
        ln1b = jnp.zeros((1, D), jnp.float32)
        wqkv = jax.random.normal(ks[0], (D, 3 * D), jnp.float32) * 0.02
        bqkv = jax.random.normal(ks[1], (1, 3 * D), jnp.float32) * 0.02
        wproj = jax.random.normal(ks[2], (D, D), jnp.float32) * 0.02
        bproj = jax.random.normal(ks[3], (1, D), jnp.float32) * 0.02
        ln2w = jnp.ones((1, D), jnp.float32)
        ln2b = jnp.zeros((1, D), jnp.float32)
        wfc1 = jax.random.normal(ks[4], (D, MLP_HID), jnp.float32) * 0.02
        bfc1 = jax.random.normal(ks[5], (1, MLP_HID), jnp.float32) * 0.02
        wfc2 = jax.random.normal(ks[6], (MLP_HID, D), jnp.float32) * 0.02
        bfc2 = jax.random.normal(ks[7], (1, D), jnp.float32) * 0.02
        blocks.append((ln1w, ln1b, wqkv, bqkv, wproj, bproj,
                       ln2w, ln2b, wfc1, bfc1, wfc2, bfc2))
    return {"patch_w": patch_w, "patch_b": patch_b, "pos": pos, "blocks": blocks}


if __name__ == "__main__":
    root = jax.random.PRNGKey(0)
    kx, kp = jax.random.split(root)
    x = jax.random.normal(kx, (B, C, 1, L), dtype=jnp.float32)   # NCHW, H == 1
    params = init_params(kp)

    out = vit_forward(x, params)
    out = jax.block_until_ready(out)
    assert out.shape == (B, N, D) and out.dtype == jnp.float32

    ref = reference_forward(x, params)
    np.testing.assert_allclose(np.asarray(out), np.asarray(ref), rtol=1e-2, atol=1e-2)

    print("KERNEL_OK")
</pallas_src>

<mosaic_0001>
module attributes {stable_mosaic.version = 11 : i64} {
  func.func @vit_fused_kernel(%arg0: memref<16x32xf32, #tpu.memory_space<vmem>>, %arg1: memref<32x32xbf16, #tpu.memory_space<vmem>>, %arg2: memref<16x32xf32, #tpu.memory_space<vmem>>, %arg3: memref<16x64xf32, #tpu.memory_space<vmem>>, %arg4: memref<64x32xf32, #tpu.memory_space<vmem>>, %arg5: memref<2x1x32xf32, #tpu.memory_space<vmem>>, %arg6: memref<2x1x32xf32, #tpu.memory_space<vmem>>, %arg7: memref<2x32x32xbf16, #tpu.memory_space<vmem>>, %arg8: memref<2x1x32xf32, #tpu.memory_space<vmem>>, %arg9: memref<2x32x32xbf16, #tpu.memory_space<vmem>>, %arg10: memref<2x1x32xf32, #tpu.memory_space<vmem>>, %arg11: memref<2x32x32xbf16, #tpu.memory_space<vmem>>, %arg12: memref<2x1x32xf32, #tpu.memory_space<vmem>>, %arg13: memref<2x32x32xbf16, #tpu.memory_space<vmem>>, %arg14: memref<2x1x32xf32, #tpu.memory_space<vmem>>, %arg15: memref<2x1x32xf32, #tpu.memory_space<vmem>>, %arg16: memref<2x1x32xf32, #tpu.memory_space<vmem>>, %arg17: memref<2x32x128xbf16, #tpu.memory_space<vmem>>, %arg18: memref<2x1x128xf32, #tpu.memory_space<vmem>>, %arg19: memref<2x128x32xbf16, #tpu.memory_space<vmem>>, %arg20: memref<2x1x32xf32, #tpu.memory_space<vmem>>, %arg21: memref<16x32xf32, #tpu.memory_space<vmem>>) attributes {dimension_semantics = [], scalar_prefetch = 0 : i64, scratch_operands = 0 : i64, tpu.core_type = #tpu.core_type<tc>} {
    %c0 = arith.constant 0 : index
    %c0_0 = arith.constant 0 : index
    %0 = vector.load %arg0[%c0, %c0_0] : memref<16x32xf32, #tpu.memory_space<vmem>>, vector<16x32xf32>
    %c0_1 = arith.constant 0 : index
    %c0_2 = arith.constant 0 : index
    %1 = vector.load %arg1[%c0_1, %c0_2] : memref<32x32xbf16, #tpu.memory_space<vmem>>, vector<32x32xbf16>
    %2 = arith.truncf %0 : vector<16x32xf32> to vector<16x32xbf16>
    %cst = arith.constant dense<0.000000e+00> : vector<16x32xf32>
    %3 = tpu.matmul %2, %1, %cst {dimension_numbers = #tpu.dot_dimension_numbers<[1], [0], [0], [1], [0, 0, 1, 1], [], []>} : vector<16x32xbf16>, vector<32x32xbf16>, vector<16x32xf32> -> vector<16x32xf32>
    %c0_3 = arith.constant 0 : index
    %c0_4 = arith.constant 0 : index
    %4 = vector.load %arg2[%c0_3, %c0_4] : memref<16x32xf32, #tpu.memory_space<vmem>>, vector<16x32xf32>
    %5 = arith.addf %3, %4 : vector<16x32xf32>
    %c0_5 = arith.constant 0 : index
    %c0_6 = arith.constant 0 : index
    %6 = vector.load %arg3[%c0_5, %c0_6] : memref<16x64xf32, #tpu.memory_space<vmem>>, vector<16x64xf32>
    %c0_7 = arith.constant 0 : index
    %c0_8 = arith.constant 0 : index
    %7 = vector.load %arg4[%c0_7, %c0_8] : memref<64x32xf32, #tpu.memory_space<vmem>>, vector<64x32xf32>
    %8 = arith.truncf %7 : vector<64x32xf32> to vector<64x32xbf16>
    %c0_9 = arith.constant 0 : index
    %c0_10 = arith.constant 0 : index
    %c0_11 = arith.constant 0 : index
    %9 = vector.load %arg5[%c0_9, %c0_10, %c0_11] : memref<2x1x32xf32, #tpu.memory_space<vmem>>, vector<1x1x32xf32>
    %10 = vector.shape_cast %9 : vector<1x1x32xf32> to vector<1x32xf32>
    %c0_12 = arith.constant 0 : index
    %c0_13 = arith.constant 0 : index
    %c0_14 = arith.constant 0 : index
    %11 = vector.load %arg6[%c0_12, %c0_13, %c0_14] : memref<2x1x32xf32, #tpu.memory_space<vmem>>, vector<1x1x32xf32>
    %12 = vector.shape_cast %11 : vector<1x1x32xf32> to vector<1x32xf32>
    %cst_15 = arith.constant dense<0.000000e+00> : vector<16xf32>
    %13 = vector.multi_reduction <add>, %5, %cst_15 [1] : vector<16x32xf32> to vector<16xf32>
    %14 = vector.shape_cast %13 : vector<16xf32> to vector<16x1xf32>
    %cst_16 = arith.constant 3.200000e+01 : f32
    %15 = vector.broadcast %cst_16 : f32 to vector<16x1xf32>
    %16 = arith.divf %14, %15 : vector<16x1xf32>
    %17 = vector.broadcast %16 : vector<16x1xf32> to vector<16x32xf32>
    %18 = arith.subf %5, %17 : vector<16x32xf32>
    %19 = arith.mulf %18, %18 : vector<16x32xf32>
    %cst_17 = arith.constant dense<0.000000e+00> : vector<16xf32>
    %20 = vector.multi_reduction <add>, %19, %cst_17 [1] : vector<16x32xf32> to vector<16xf32>
    %21 = vector.shape_cast %20 : vector<16xf32> to vector<16x1xf32>
    %cst_18 = arith.constant 3.200000e+01 : f32
    %22 = vector.broadcast %cst_18 : f32 to vector<16x1xf32>
    %23 = arith.divf %21, %22 : vector<16x1xf32>
    %24 = vector.broadcast %16 : vector<16x1xf32> to vector<16x32xf32>
    %25 = arith.subf %5, %24 : vector<16x32xf32>
    %cst_19 = arith.constant 9.99999974E-6 : f32
    %26 = vector.broadcast %cst_19 : f32 to vector<16x1xf32>
    %27 = arith.addf %23, %26 : vector<16x1xf32>
    %28 = math.rsqrt %27 : vector<16x1xf32>
    %29 = vector.broadcast %28 : vector<16x1xf32> to vector<16x32xf32>
    %30 = arith.mulf %25, %29 : vector<16x32xf32>
    %31 = vector.broadcast %10 : vector<1x32xf32> to vector<16x32xf32>
    %32 = arith.mulf %30, %31 : vector<16x32xf32>
    %33 = vector.broadcast %12 : vector<1x32xf32> to vector<16x32xf32>
    %34 = arith.addf %32, %33 : vector<16x32xf32>
    %c0_20 = arith.constant 0 : index
    %c0_21 = arith.constant 0 : index
    %c0_22 = arith.constant 0 : index
    %35 = vector.load %arg7[%c0_20, %c0_21, %c0_22] : memref<2x32x32xbf16, #tpu.memory_space<vmem>>, vector<1x32x32xbf16>
    %36 = vector.shape_cast %35 : vector<1x32x32xbf16> to vector<32x32xbf16>
    %37 = arith.truncf %34 : vector<16x32xf32> to vector<16x32xbf16>
    %cst_23 = arith.constant dense<0.000000e+00> : vector<16x32xf32>
    %38 = tpu.matmul %37, %36, %cst_23 {dimension_numbers = #tpu.dot_dimension_numbers<[1], [0], [0], [1], [0, 0, 1, 1], [], []>} : vector<16x32xbf16>, vector<32x32xbf16>, vector<16x32xf32> -> vector<16x32xf32>
    %c0_24 = arith.constant 0 : index
    %c0_25 = arith.constant 0 : index
    %c0_26 = arith.constant 0 : index
    %39 = vector.load %arg8[%c0_24, %c0_25, %c0_26] : memref<2x1x32xf32, #tpu.memory_space<vmem>>, vector<1x1x32xf32>
    %40 = vector.shape_cast %39 : vector<1x1x32xf32> to vector<1x32xf32>
    %41 = vector.broadcast %40 : vector<1x32xf32> to vector<16x32xf32>
    %42 = arith.addf %38, %41 : vector<16x32xf32>
    %c0_27 = arith.constant 0 : index
    %c0_28 = arith.constant 0 : index
    %c0_29 = arith.constant 0 : index
    %43 = vector.load %arg9[%c0_27, %c0_28, %c0_29] : memref<2x32x32xbf16, #tpu.memory_space<vmem>>, vector<1x32x32xbf16>
    %44 = vector.shape_cast %43 : vector<1x32x32xbf16> to vector<32x32xbf16>
    %45 = arith.truncf %34 : vector<16x32xf32> to vector<16x32xbf16>
    %cst_30 = arith.constant dense<0.000000e+00> : vector<16x32xf32>
    %46 = tpu.matmul %45, %44, %cst_30 {dimension_numbers = #tpu.dot_dimension_numbers<[1], [0], [0], [1], [0, 0, 1, 1], [], []>} : vector<16x32xbf16>, vector<32x32xbf16>, vector<16x32xf32> -> vector<16x32xf32>
    %c0_31 = arith.constant 0 : index
    %c0_32 = arith.constant 0 : index
    %c0_33 = arith.constant 0 : index
    %47 = vector.load %arg10[%c0_31, %c0_32, %c0_33] : memref<2x1x32xf32, #tpu.memory_space<vmem>>, vector<1x1x32xf32>
    %48 = vector.shape_cast %47 : vector<1x1x32xf32> to vector<1x32xf32>
    %49 = vector.broadcast %48 : vector<1x32xf32> to vector<16x32xf32>
    %50 = arith.addf %46, %49 : vector<16x32xf32>
    %c0_34 = arith.constant 0 : index
    %c0_35 = arith.constant 0 : index
    %c0_36 = arith.constant 0 : index
    %51 = vector.load %arg11[%c0_34, %c0_35, %c0_36] : memref<2x32x32xbf16, #tpu.memory_space<vmem>>, vector<1x32x32xbf16>
    %52 = vector.shape_cast %51 : vector<1x32x32xbf16> to vector<32x32xbf16>
    %53 = arith.truncf %34 : vector<16x32xf32> to vector<16x32xbf16>
    %cst_37 = arith.constant dense<0.000000e+00> : vector<16x32xf32>
    %54 = tpu.matmul %53, %52, %cst_37 {dimension_numbers = #tpu.dot_dimension_numbers<[1], [0], [0], [1], [0, 0, 1, 1], [], []>} : vector<16x32xbf16>, vector<32x32xbf16>, vector<16x32xf32> -> vector<16x32xf32>
    %c0_38 = arith.constant 0 : index
    %c0_39 = arith.constant 0 : index
    %c0_40 = arith.constant 0 : index
    %55 = vector.load %arg12[%c0_38, %c0_39, %c0_40] : memref<2x1x32xf32, #tpu.memory_space<vmem>>, vector<1x1x32xf32>
    %56 = vector.shape_cast %55 : vector<1x1x32xf32> to vector<1x32xf32>
    %57 = vector.broadcast %56 : vector<1x32xf32> to vector<16x32xf32>
    %58 = arith.addf %54, %57 : vector<16x32xf32>
    %59 = tpu.concatenate %50, %50, %50, %50 in 0 : vector<16x32xf32>, vector<16x32xf32>, vector<16x32xf32>, vector<16x32xf32> -> vector<64x32xf32>
    %60 = arith.mulf %59, %7 : vector<64x32xf32>
    %61 = tpu.concatenate %58, %58, %58, %58 in 0 : vector<16x32xf32>, vector<16x32xf32>, vector<16x32xf32>, vector<16x32xf32> -> vector<64x32xf32>
    %62 = arith.mulf %61, %7 : vector<64x32xf32>
    %63 = arith.truncf %42 : vector<16x32xf32> to vector<16x32xbf16>
    %64 = arith.truncf %60 : vector<64x32xf32> to vector<64x32xbf16>
    %cst_41 = arith.constant dense<0.000000e+00> : vector<16x64xf32>
    %65 = tpu.matmul %63, %64, %cst_41 {dimension_numbers = #tpu.dot_dimension_numbers<[1], [1], [0], [0], [0, 0, 1, 0], [], []>} : vector<16x32xbf16>, vector<64x32xbf16>, vector<16x64xf32> -> vector<16x64xf32>
    %66 = arith.addf %65, %6 : vector<16x64xf32>
    %cst_42 = arith.constant dense<0xFF800000> : vector<16xf32>
    %67 = vector.multi_reduction <maximumf>, %66, %cst_42 [1] : vector<16x64xf32> to vector<16xf32>
    %68 = vector.shape_cast %67 : vector<16xf32> to vector<16x1xf32>
    %69 = vector.broadcast %68 : vector<16x1xf32> to vector<16x64xf32>
    %70 = arith.subf %66, %69 : vector<16x64xf32>
    %71 = math.exp %70 : vector<16x64xf32>
    %72 = arith.truncf %71 : vector<16x64xf32> to vector<16x64xbf16>
    %73 = arith.truncf %62 : vector<64x32xf32> to vector<64x32xbf16>
    %cst_43 = arith.constant dense<0.000000e+00> : vector<16x32xf32>
    %74 = tpu.matmul %72, %73, %cst_43 {dimension_numbers = #tpu.dot_dimension_numbers<[1], [0], [0], [1], [0, 0, 1, 1], [], []>} : vector<16x64xbf16>, vector<64x32xbf16>, vector<16x32xf32> -> vector<16x32xf32>
    %cst_44 = arith.constant dense<0.000000e+00> : vector<16x32xf32>
    %75 = tpu.matmul %72, %8, %cst_44 {dimension_numbers = #tpu.dot_dimension_numbers<[1], [0], [0], [1], [0, 0, 1, 1], [], []>} : vector<16x64xbf16>, vector<64x32xbf16>, vector<16x32xf32> -> vector<16x32xf32>
    %76 = tpu.reciprocal %75 {approx = true} : vector<16x32xf32> -> vector<16x32xf32>
    %77 = arith.mulf %74, %76 : vector<16x32xf32>
    %c0_45 = arith.constant 0 : index
    %c0_46 = arith.constant 0 : index
    %c0_47 = arith.constant 0 : index
    %78 = vector.load %arg13[%c0_45, %c0_46, %c0_47] : memref<2x32x32xbf16, #tpu.memory_space<vmem>>, vector<1x32x32xbf16>
    %79 = vector.shape_cast %78 : vector<1x32x32xbf16> to vector<32x32xbf16>
    %80 = arith.truncf %77 : vector<16x32xf32> to vector<16x32xbf16>
    %cst_48 = arith.constant dense<0.000000e+00> : vector<16x32xf32>
    %81 = tpu.matmul %80, %79, %cst_48 {dimension_numbers = #tpu.dot_dimension_numbers<[1], [0], [0], [1], [0, 0, 1, 1], [], []>} : vector<16x32xbf16>, vector<32x32xbf16>, vector<16x32xf32> -> vector<16x32xf32>
    %82 = arith.addf %5, %81 : vector<16x32xf32>
    %c0_49 = arith.constant 0 : index
    %c0_50 = arith.constant 0 : index
    %c0_51 = arith.constant 0 : index
    %83 = vector.load %arg14[%c0_49, %c0_50, %c0_51] : memref<2x1x32xf32, #tpu.memory_space<vmem>>, vector<1x1x32xf32>
    %84 = vector.shape_cast %83 : vector<1x1x32xf32> to vector<1x32xf32>
    %85 = vector.broadcast %84 : vector<1x32xf32> to vector<16x32xf32>
    %86 = arith.addf %82, %85 : vector<16x32xf32>
    %c0_52 = arith.constant 0 : index
    %c0_53 = arith.constant 0 : index
    %c0_54 = arith.constant 0 : index
    %87 = vector.load %arg15[%c0_52, %c0_53, %c0_54] : memref<2x1x32xf32, #tpu.memory_space<vmem>>, vector<1x1x32xf32>
    %88 = vector.shape_cast %87 : vector<1x1x32xf32> to vector<1x32xf32>
    %c0_55 = arith.constant 0 : index
    %c0_56 = arith.constant 0 : index
    %c0_57 = arith.constant 0 : index
    %89 = vector.load %arg16[%c0_55, %c0_56, %c0_57] : memref<2x1x32xf32, #tpu.memory_space<vmem>>, vector<1x1x32xf32>
    %90 = vector.shape_cast %89 : vector<1x1x32xf32> to vector<1x32xf32>
    %cst_58 = arith.constant dense<0.000000e+00> : vector<16xf32>
    %91 = vector.multi_reduction <add>, %86, %cst_58 [1] : vector<16x32xf32> to vector<16xf32>
    %92 = vector.shape_cast %91 : vector<16xf32> to vector<16x1xf32>
    %cst_59 = arith.constant 3.200000e+01 : f32
    %93 = vector.broadcast %cst_59 : f32 to vector<16x1xf32>
    %94 = arith.divf %92, %93 : vector<16x1xf32>
    %95 = vector.broadcast %94 : vector<16x1xf32> to vector<16x32xf32>
    %96 = arith.subf %86, %95 : vector<16x32xf32>
    %97 = arith.mulf %96, %96 : vector<16x32xf32>
    %cst_60 = arith.constant dense<0.000000e+00> : vector<16xf32>
    %98 = vector.multi_reduction <add>, %97, %cst_60 [1] : vector<16x32xf32> to vector<16xf32>
    %99 = vector.shape_cast %98 : vector<16xf32> to vector<16x1xf32>
    %cst_61 = arith.constant 3.200000e+01 : f32
    %100 = vector.broadcast %cst_61 : f32 to vector<16x1xf32>
    %101 = arith.divf %99, %100 : vector<16x1xf32>
    %102 = vector.broadcast %94 : vector<16x1xf32> to vector<16x32xf32>
    %103 = arith.subf %86, %102 : vector<16x32xf32>
    %cst_62 = arith.constant 9.99999974E-6 : f32
    %104 = vector.broadcast %cst_62 : f32 to vector<16x1xf32>
    %105 = arith.addf %101, %104 : vector<16x1xf32>
    %106 = math.rsqrt %105 : vector<16x1xf32>
    %107 = vector.broadcast %106 : vector<16x1xf32> to vector<16x32xf32>
    %108 = arith.mulf %103, %107 : vector<16x32xf32>
    %109 = vector.broadcast %88 : vector<1x32xf32> to vector<16x32xf32>
    %110 = arith.mulf %108, %109 : vector<16x32xf32>
    %111 = vector.broadcast %90 : vector<1x32xf32> to vector<16x32xf32>
    %112 = arith.addf %110, %111 : vector<16x32xf32>
    %c0_63 = arith.constant 0 : index
    %c0_64 = arith.constant 0 : index
    %c0_65 = arith.constant 0 : index
    %113 = vector.load %arg17[%c0_63, %c0_64, %c0_65] : memref<2x32x128xbf16, #tpu.memory_space<vmem>>, vector<1x32x128xbf16>
    %114 = vector.shape_cast %113 : vector<1x32x128xbf16> to vector<32x128xbf16>
    %115 = arith.truncf %112 : vector<16x32xf32> to vector<16x32xbf16>
    %cst_66 = arith.constant dense<0.000000e+00> : vector<16x128xf32>
    %116 = tpu.matmul %115, %114, %cst_66 {dimension_numbers = #tpu.dot_dimension_numbers<[1], [0], [0], [1], [0, 0, 1, 1], [], []>} : vector<16x32xbf16>, vector<32x128xbf16>, vector<16x128xf32> -> vector<16x128xf32>
    %c0_67 = arith.constant 0 : index
    %c0_68 = arith.constant 0 : index
    %c0_69 = arith.constant 0 : index
    %117 = vector.load %arg18[%c0_67, %c0_68, %c0_69] : memref<2x1x128xf32, #tpu.memory_space<vmem>>, vector<1x1x128xf32>
    %118 = vector.shape_cast %117 : vector<1x1x128xf32> to vector<1x128xf32>
    %119 = vector.broadcast %118 : vector<1x128xf32> to vector<16x128xf32>
    %120 = arith.addf %116, %119 : vector<16x128xf32>
    %cst_70 = arith.constant 5.000000e-01 : f32
    %121 = vector.broadcast %cst_70 : f32 to vector<16x128xf32>
    %122 = arith.mulf %121, %120 : vector<16x128xf32>
    %cst_71 = arith.constant 4.471500e-02 : f32
    %123 = vector.broadcast %cst_71 : f32 to vector<16x128xf32>
    %124 = arith.mulf %123, %120 : vector<16x128xf32>
    %125 = arith.mulf %124, %120 : vector<16x128xf32>
    %126 = arith.mulf %125, %120 : vector<16x128xf32>
    %127 = arith.addf %120, %126 : vector<16x128xf32>
    %cst_72 = arith.constant 0.797884583 : f32
    %128 = vector.broadcast %cst_72 : f32 to vector<16x128xf32>
    %129 = arith.mulf %128, %127 : vector<16x128xf32>
    %130 = math.tanh %129 : vector<16x128xf32>
    %cst_73 = arith.constant 1.000000e+00 : f32
    %131 = vector.broadcast %cst_73 : f32 to vector<16x128xf32>
    %132 = arith.addf %131, %130 : vector<16x128xf32>
    %133 = arith.mulf %122, %132 : vector<16x128xf32>
    %c0_74 = arith.constant 0 : index
    %c0_75 = arith.constant 0 : index
    %c0_76 = arith.constant 0 : index
    %134 = vector.load %arg19[%c0_74, %c0_75, %c0_76] : memref<2x128x32xbf16, #tpu.memory_space<vmem>>, vector<1x128x32xbf16>
    %135 = vector.shape_cast %134 : vector<1x128x32xbf16> to vector<128x32xbf16>
    %136 = arith.truncf %133 : vector<16x128xf32> to vector<16x128xbf16>
    %cst_77 = arith.constant dense<0.000000e+00> : vector<16x32xf32>
    %137 = tpu.matmul %136, %135, %cst_77 {dimension_numbers = #tpu.dot_dimension_numbers<[1], [0], [0], [1], [0, 0, 1, 1], [], []>} : vector<16x128xbf16>, vector<128x32xbf16>, vector<16x32xf32> -> vector<16x32xf32>
    %138 = arith.addf %86, %137 : vector<16x32xf32>
    %c0_78 = arith.constant 0 : index
    %c0_79 = arith.constant 0 : index
    %c0_80 = arith.constant 0 : index
    %139 = vector.load %arg20[%c0_78, %c0_79, %c0_80] : memref<2x1x32xf32, #tpu.memory_space<vmem>>, vector<1x1x32xf32>
    %140 = vector.shape_cast %139 : vector<1x1x32xf32> to vector<1x32xf32>
    %141 = vector.broadcast %140 : vector<1x32xf32> to vector<16x32xf32>
    %142 = arith.addf %138, %141 : vector<16x32xf32>
    %c1 = arith.constant 1 : index
    %c0_81 = arith.constant 0 : index
    %c0_82 = arith.constant 0 : index
    %143 = vector.load %arg5[%c1, %c0_81, %c0_82] : memref<2x1x32xf32, #tpu.memory_space<vmem>>, vector<1x1x32xf32>
    %144 = vector.shape_cast %143 : vector<1x1x32xf32> to vector<1x32xf32>
    %c1_83 = arith.constant 1 : index
    %c0_84 = arith.constant 0 : index
    %c0_85 = arith.constant 0 : index
    %145 = vector.load %arg6[%c1_83, %c0_84, %c0_85] : memref<2x1x32xf32, #tpu.memory_space<vmem>>, vector<1x1x32xf32>
    %146 = vector.shape_cast %145 : vector<1x1x32xf32> to vector<1x32xf32>
    %cst_86 = arith.constant dense<0.000000e+00> : vector<16xf32>
    %147 = vector.multi_reduction <add>, %142, %cst_86 [1] : vector<16x32xf32> to vector<16xf32>
    %148 = vector.shape_cast %147 : vector<16xf32> to vector<16x1xf32>
    %cst_87 = arith.constant 3.200000e+01 : f32
    %149 = vector.broadcast %cst_87 : f32 to vector<16x1xf32>
    %150 = arith.divf %148, %149 : vector<16x1xf32>
    %151 = vector.broadcast %150 : vector<16x1xf32> to vector<16x32xf32>
    %152 = arith.subf %142, %151 : vector<16x32xf32>
    %153 = arith.mulf %152, %152 : vector<16x32xf32>
    %cst_88 = arith.constant dense<0.000000e+00> : vector<16xf32>
    %154 = vector.multi_reduction <add>, %153, %cst_88 [1] : vector<16x32xf32> to vector<16xf32>
    %155 = vector.shape_cast %154 : vector<16xf32> to vector<16x1xf32>
    %cst_89 = arith.constant 3.200000e+01 : f32
    %156 = vector.broadcast %cst_89 : f32 to vector<16x1xf32>
    %157 = arith.divf %155, %156 : vector<16x1xf32>
    %158 = vector.broadcast %150 : vector<16x1xf32> to vector<16x32xf32>
    %159 = arith.subf %142, %158 : vector<16x32xf32>
    %cst_90 = arith.constant 9.99999974E-6 : f32
    %160 = vector.broadcast %cst_90 : f32 to vector<16x1xf32>
    %161 = arith.addf %157, %160 : vector<16x1xf32>
    %162 = math.rsqrt %161 : vector<16x1xf32>
    %163 = vector.broadcast %162 : vector<16x1xf32> to vector<16x32xf32>
    %164 = arith.mulf %159, %163 : vector<16x32xf32>
    %165 = vector.broadcast %144 : vector<1x32xf32> to vector<16x32xf32>
    %166 = arith.mulf %164, %165 : vector<16x32xf32>
    %167 = vector.broadcast %146 : vector<1x32xf32> to vector<16x32xf32>
    %168 = arith.addf %166, %167 : vector<16x32xf32>
    %c1_91 = arith.constant 1 : index
    %c0_92 = arith.constant 0 : index
    %c0_93 = arith.constant 0 : index
    %169 = vector.load %arg7[%c1_91, %c0_92, %c0_93] : memref<2x32x32xbf16, #tpu.memory_space<vmem>>, vector<1x32x32xbf16>
    %170 = vector.shape_cast %169 : vector<1x32x32xbf16> to vector<32x32xbf16>
    %171 = arith.truncf %168 : vector<16x32xf32> to vector<16x32xbf16>
    %cst_94 = arith.constant dense<0.000000e+00> : vector<16x32xf32>
    %172 = tpu.matmul %171, %170, %cst_94 {dimension_numbers = #tpu.dot_dimension_numbers<[1], [0], [0], [1], [0, 0, 1, 1], [], []>} : vector<16x32xbf16>, vector<32x32xbf16>, vector<16x32xf32> -> vector<16x32xf32>
    %c1_95 = arith.constant 1 : index
    %c0_96 = arith.constant 0 : index
    %c0_97 = arith.constant 0 : index
    %173 = vector.load %arg8[%c1_95, %c0_96, %c0_97] : memref<2x1x32xf32, #tpu.memory_space<vmem>>, vector<1x1x32xf32>
    %174 = vector.shape_cast %173 : vector<1x1x32xf32> to vector<1x32xf32>
    %175 = vector.broadcast %174 : vector<1x32xf32> to vector<16x32xf32>
    %176 = arith.addf %172, %175 : vector<16x32xf32>
    %c1_98 = arith.constant 1 : index
    %c0_99 = arith.constant 0 : index
    %c0_100 = arith.constant 0 : index
    %177 = vector.load %arg9[%c1_98, %c0_99, %c0_100] : memref<2x32x32xbf16, #tpu.memory_space<vmem>>, vector<1x32x32xbf16>
    %178 = vector.shape_cast %177 : vector<1x32x32xbf16> to vector<32x32xbf16>
    %179 = arith.truncf %168 : vector<16x32xf32> to vector<16x32xbf16>
    %cst_101 = arith.constant dense<0.000000e+00> : vector<16x32xf32>
    %180 = tpu.matmul %179, %178, %cst_101 {dimension_numbers = #tpu.dot_dimension_numbers<[1], [0], [0], [1], [0, 0, 1, 1], [], []>} : vector<16x32xbf16>, vector<32x32xbf16>, vector<16x32xf32> -> vector<16x32xf32>
    %c1_102 = arith.constant 1 : index
    %c0_103 = arith.constant 0 : index
    %c0_104 = arith.constant 0 : index
    %181 = vector.load %arg10[%c1_102, %c0_103, %c0_104] : memref<2x1x32xf32, #tpu.memory_space<vmem>>, vector<1x1x32xf32>
    %182 = vector.shape_cast %181 : vector<1x1x32xf32> to vector<1x32xf32>
    %183 = vector.broadcast %182 : vector<1x32xf32> to vector<16x32xf32>
    %184 = arith.addf %180, %183 : vector<16x32xf32>
    %c1_105 = arith.constant 1 : index
    %c0_106 = arith.constant 0 : index
    %c0_107 = arith.constant 0 : index
    %185 = vector.load %arg11[%c1_105, %c0_106, %c0_107] : memref<2x32x32xbf16, #tpu.memory_space<vmem>>, vector<1x32x32xbf16>
    %186 = vector.shape_cast %185 : vector<1x32x32xbf16> to vector<32x32xbf16>
    %187 = arith.truncf %168 : vector<16x32xf32> to vector<16x32xbf16>
    %cst_108 = arith.constant dense<0.000000e+00> : vector<16x32xf32>
    %188 = tpu.matmul %187, %186, %cst_108 {dimension_numbers = #tpu.dot_dimension_numbers<[1], [0], [0], [1], [0, 0, 1, 1], [], []>} : vector<16x32xbf16>, vector<32x32xbf16>, vector<16x32xf32> -> vector<16x32xf32>
    %c1_109 = arith.constant 1 : index
    %c0_110 = arith.constant 0 : index
    %c0_111 = arith.constant 0 : index
    %189 = vector.load %arg12[%c1_109, %c0_110, %c0_111] : memref<2x1x32xf32, #tpu.memory_space<vmem>>, vector<1x1x32xf32>
    %190 = vector.shape_cast %189 : vector<1x1x32xf32> to vector<1x32xf32>
    %191 = vector.broadcast %190 : vector<1x32xf32> to vector<16x32xf32>
    %192 = arith.addf %188, %191 : vector<16x32xf32>
    %193 = tpu.concatenate %184, %184, %184, %184 in 0 : vector<16x32xf32>, vector<16x32xf32>, vector<16x32xf32>, vector<16x32xf32> -> vector<64x32xf32>
    %194 = arith.mulf %193, %7 : vector<64x32xf32>
    %195 = tpu.concatenate %192, %192, %192, %192 in 0 : vector<16x32xf32>, vector<16x32xf32>, vector<16x32xf32>, vector<16x32xf32> -> vector<64x32xf32>
    %196 = arith.mulf %195, %7 : vector<64x32xf32>
    %197 = arith.truncf %176 : vector<16x32xf32> to vector<16x32xbf16>
    %198 = arith.truncf %194 : vector<64x32xf32> to vector<64x32xbf16>
    %cst_112 = arith.constant dense<0.000000e+00> : vector<16x64xf32>
    %199 = tpu.matmul %197, %198, %cst_112 {dimension_numbers = #tpu.dot_dimension_numbers<[1], [1], [0], [0], [0, 0, 1, 0], [], []>} : vector<16x32xbf16>, vector<64x32xbf16>, vector<16x64xf32> -> vector<16x64xf32>
    %200 = arith.addf %199, %6 : vector<16x64xf32>
    %cst_113 = arith.constant dense<0xFF800000> : vector<16xf32>
    %201 = vector.multi_reduction <maximumf>, %200, %cst_113 [1] : vector<16x64xf32> to vector<16xf32>
    %202 = vector.shape_cast %201 : vector<16xf32> to vector<16x1xf32>
    %203 = vector.broadcast %202 : vector<16x1xf32> to vector<16x64xf32>
    %204 = arith.subf %200, %203 : vector<16x64xf32>
    %205 = math.exp %204 : vector<16x64xf32>
    %206 = arith.truncf %205 : vector<16x64xf32> to vector<16x64xbf16>
    %207 = arith.truncf %196 : vector<64x32xf32> to vector<64x32xbf16>
    %cst_114 = arith.constant dense<0.000000e+00> : vector<16x32xf32>
    %208 = tpu.matmul %206, %207, %cst_114 {dimension_numbers = #tpu.dot_dimension_numbers<[1], [0], [0], [1], [0, 0, 1, 1], [], []>} : vector<16x64xbf16>, vector<64x32xbf16>, vector<16x32xf32> -> vector<16x32xf32>
    %cst_115 = arith.constant dense<0.000000e+00> : vector<16x32xf32>
    %209 = tpu.matmul %206, %8, %cst_115 {dimension_numbers = #tpu.dot_dimension_numbers<[1], [0], [0], [1], [0, 0, 1, 1], [], []>} : vector<16x64xbf16>, vector<64x32xbf16>, vector<16x32xf32> -> vector<16x32xf32>
    %210 = tpu.reciprocal %209 {approx = true} : vector<16x32xf32> -> vector<16x32xf32>
    %211 = arith.mulf %208, %210 : vector<16x32xf32>
    %c1_116 = arith.constant 1 : index
    %c0_117 = arith.constant 0 : index
    %c0_118 = arith.constant 0 : index
    %212 = vector.load %arg13[%c1_116, %c0_117, %c0_118] : memref<2x32x32xbf16, #tpu.memory_space<vmem>>, vector<1x32x32xbf16>
    %213 = vector.shape_cast %212 : vector<1x32x32xbf16> to vector<32x32xbf16>
    %214 = arith.truncf %211 : vector<16x32xf32> to vector<16x32xbf16>
    %cst_119 = arith.constant dense<0.000000e+00> : vector<16x32xf32>
    %215 = tpu.matmul %214, %213, %cst_119 {dimension_numbers = #tpu.dot_dimension_numbers<[1], [0], [0], [1], [0, 0, 1, 1], [], []>} : vector<16x32xbf16>, vector<32x32xbf16>, vector<16x32xf32> -> vector<16x32xf32>
    %216 = arith.addf %142, %215 : vector<16x32xf32>
    %c1_120 = arith.constant 1 : index
    %c0_121 = arith.constant 0 : index
    %c0_122 = arith.constant 0 : index
    %217 = vector.load %arg14[%c1_120, %c0_121, %c0_122] : memref<2x1x32xf32, #tpu.memory_space<vmem>>, vector<1x1x32xf32>
    %218 = vector.shape_cast %217 : vector<1x1x32xf32> to vector<1x32xf32>
    %219 = vector.broadcast %218 : vector<1x32xf32> to vector<16x32xf32>
    %220 = arith.addf %216, %219 : vector<16x32xf32>
    %c1_123 = arith.constant 1 : index
    %c0_124 = arith.constant 0 : index
    %c0_125 = arith.constant 0 : index
    %221 = vector.load %arg15[%c1_123, %c0_124, %c0_125] : memref<2x1x32xf32, #tpu.memory_space<vmem>>, vector<1x1x32xf32>
    %222 = vector.shape_cast %221 : vector<1x1x32xf32> to vector<1x32xf32>
    %c1_126 = arith.constant 1 : index
    %c0_127 = arith.constant 0 : index
    %c0_128 = arith.constant 0 : index
    %223 = vector.load %arg16[%c1_126, %c0_127, %c0_128] : memref<2x1x32xf32, #tpu.memory_space<vmem>>, vector<1x1x32xf32>
    %224 = vector.shape_cast %223 : vector<1x1x32xf32> to vector<1x32xf32>
    %cst_129 = arith.constant dense<0.000000e+00> : vector<16xf32>
    %225 = vector.multi_reduction <add>, %220, %cst_129 [1] : vector<16x32xf32> to vector<16xf32>
    %226 = vector.shape_cast %225 : vector<16xf32> to vector<16x1xf32>
    %cst_130 = arith.constant 3.200000e+01 : f32
    %227 = vector.broadcast %cst_130 : f32 to vector<16x1xf32>
    %228 = arith.divf %226, %227 : vector<16x1xf32>
    %229 = vector.broadcast %228 : vector<16x1xf32> to vector<16x32xf32>
    %230 = arith.subf %220, %229 : vector<16x32xf32>
    %231 = arith.mulf %230, %230 : vector<16x32xf32>
    %cst_131 = arith.constant dense<0.000000e+00> : vector<16xf32>
    %232 = vector.multi_reduction <add>, %231, %cst_131 [1] : vector<16x32xf32> to vector<16xf32>
    %233 = vector.shape_cast %232 : vector<16xf32> to vector<16x1xf32>
    %cst_132 = arith.constant 3.200000e+01 : f32
    %234 = vector.broadcast %cst_132 : f32 to vector<16x1xf32>
    %235 = arith.divf %233, %234 : vector<16x1xf32>
    %236 = vector.broadcast %228 : vector<16x1xf32> to vector<16x32xf32>
    %237 = arith.subf %220, %236 : vector<16x32xf32>
    %cst_133 = arith.constant 9.99999974E-6 : f32
    %238 = vector.broadcast %cst_133 : f32 to vector<16x1xf32>
    %239 = arith.addf %235, %238 : vector<16x1xf32>
    %240 = math.rsqrt %239 : vector<16x1xf32>
    %241 = vector.broadcast %240 : vector<16x1xf32> to vector<16x32xf32>
    %242 = arith.mulf %237, %241 : vector<16x32xf32>
    %243 = vector.broadcast %222 : vector<1x32xf32> to vector<16x32xf32>
    %244 = arith.mulf %242, %243 : vector<16x32xf32>
    %245 = vector.broadcast %224 : vector<1x32xf32> to vector<16x32xf32>
    %246 = arith.addf %244, %245 : vector<16x32xf32>
    %c1_134 = arith.constant 1 : index
    %c0_135 = arith.constant 0 : index
    %c0_136 = arith.constant 0 : index
    %247 = vector.load %arg17[%c1_134, %c0_135, %c0_136] : memref<2x32x128xbf16, #tpu.memory_space<vmem>>, vector<1x32x128xbf16>
    %248 = vector.shape_cast %247 : vector<1x32x128xbf16> to vector<32x128xbf16>
    %249 = arith.truncf %246 : vector<16x32xf32> to vector<16x32xbf16>
    %cst_137 = arith.constant dense<0.000000e+00> : vector<16x128xf32>
    %250 = tpu.matmul %249, %248, %cst_137 {dimension_numbers = #tpu.dot_dimension_numbers<[1], [0], [0], [1], [0, 0, 1, 1], [], []>} : vector<16x32xbf16>, vector<32x128xbf16>, vector<16x128xf32> -> vector<16x128xf32>
    %c1_138 = arith.constant 1 : index
    %c0_139 = arith.constant 0 : index
    %c0_140 = arith.constant 0 : index
    %251 = vector.load %arg18[%c1_138, %c0_139, %c0_140] : memref<2x1x128xf32, #tpu.memory_space<vmem>>, vector<1x1x128xf32>
    %252 = vector.shape_cast %251 : vector<1x1x128xf32> to vector<1x128xf32>
    %253 = vector.broadcast %252 : vector<1x128xf32> to vector<16x128xf32>
    %254 = arith.addf %250, %253 : vector<16x128xf32>
    %cst_141 = arith.constant 5.000000e-01 : f32
    %255 = vector.broadcast %cst_141 : f32 to vector<16x128xf32>
    %256 = arith.mulf %255, %254 : vector<16x128xf32>
    %cst_142 = arith.constant 4.471500e-02 : f32
    %257 = vector.broadcast %cst_142 : f32 to vector<16x128xf32>
    %258 = arith.mulf %257, %254 : vector<16x128xf32>
    %259 = arith.mulf %258, %254 : vector<16x128xf32>
    %260 = arith.mulf %259, %254 : vector<16x128xf32>
    %261 = arith.addf %254, %260 : vector<16x128xf32>
    %cst_143 = arith.constant 0.797884583 : f32
    %262 = vector.broadcast %cst_143 : f32 to vector<16x128xf32>
    %263 = arith.mulf %262, %261 : vector<16x128xf32>
    %264 = math.tanh %263 : vector<16x128xf32>
    %cst_144 = arith.constant 1.000000e+00 : f32
    %265 = vector.broadcast %cst_144 : f32 to vector<16x128xf32>
    %266 = arith.addf %265, %264 : vector<16x128xf32>
    %267 = arith.mulf %256, %266 : vector<16x128xf32>
    %c1_145 = arith.constant 1 : index
    %c0_146 = arith.constant 0 : index
    %c0_147 = arith.constant 0 : index
    %268 = vector.load %arg19[%c1_145, %c0_146, %c0_147] : memref<2x128x32xbf16, #tpu.memory_space<vmem>>, vector<1x128x32xbf16>
    %269 = vector.shape_cast %268 : vector<1x128x32xbf16> to vector<128x32xbf16>
    %270 = arith.truncf %267 : vector<16x128xf32> to vector<16x128xbf16>
    %cst_148 = arith.constant dense<0.000000e+00> : vector<16x32xf32>
    %271 = tpu.matmul %270, %269, %cst_148 {dimension_numbers = #tpu.dot_dimension_numbers<[1], [0], [0], [1], [0, 0, 1, 1], [], []>} : vector<16x128xbf16>, vector<128x32xbf16>, vector<16x32xf32> -> vector<16x32xf32>
    %272 = arith.addf %220, %271 : vector<16x32xf32>
    %c1_149 = arith.constant 1 : index
    %c0_150 = arith.constant 0 : index
    %c0_151 = arith.constant 0 : index
    %273 = vector.load %arg20[%c1_149, %c0_150, %c0_151] : memref<2x1x32xf32, #tpu.memory_space<vmem>>, vector<1x1x32xf32>
    %274 = vector.shape_cast %273 : vector<1x1x32xf32> to vector<1x32xf32>
    %275 = vector.broadcast %274 : vector<1x32xf32> to vector<16x32xf32>
    %276 = arith.addf %272, %275 : vector<16x32xf32>
    %c0_152 = arith.constant 0 : index
    %c0_153 = arith.constant 0 : index
    %277 = vector.load %arg21[%c0_152, %c0_153] : memref<16x32xf32, #tpu.memory_space<vmem>>, vector<16x32xf32>
    tpu.vector_store %arg21[%c0_152, %c0_153], %276 {strides = array<i32>} : memref<16x32xf32, #tpu.memory_space<vmem>>, vector<16x32xf32>,
    return
  }
}

</mosaic_0001>

<llo_original>
// kernel: vit_forward.1
$region0: #{vit_forward.1}
  #allocation0 [shape = 'u32[]', space=smem, size = 0x4, offset = 0x4, fixed_abs, tag = 'smem constant byte address 0x4 - core index']
  #allocation1 [shape = 'u32[144,128]{1,0:T(1,128)}', space=vmem, size = 0x12000, scoped, tag = 'internal scratch']
  %s0 = inlined_call_operand.vmem [shape: f32[16,32], index: 0, kind: input, shape index: {}]
  %s1 = inlined_call_operand.vmem [shape: bf16[32,32], index: 1, kind: input, shape index: {}]
  %s2 = inlined_call_operand.vmem [shape: f32[16,32], index: 2, kind: input, shape index: {}]
  %s3 = inlined_call_operand.vmem [shape: f32[16,64], index: 3, kind: input, shape index: {}]
  %s4 = inlined_call_operand.vmem [shape: f32[64,32], index: 4, kind: input, shape index: {}]
  %s5 = inlined_call_operand.vmem [shape: f32[2,1,32], index: 5, kind: input, shape index: {}]
  %s6 = inlined_call_operand.vmem [shape: f32[2,1,32], index: 6, kind: input, shape index: {}]
  %s7 = inlined_call_operand.vmem [shape: bf16[2,32,32], index: 7, kind: input, shape index: {}]
  %s8 = inlined_call_operand.vmem [shape: f32[2,1,32], index: 8, kind: input, shape index: {}]
  %s9 = inlined_call_operand.vmem [shape: bf16[2,32,32], index: 9, kind: input, shape index: {}]
  %s10 = inlined_call_operand.vmem [shape: f32[2,1,32], index: 10, kind: input, shape index: {}]
  %s11 = inlined_call_operand.vmem [shape: bf16[2,32,32], index: 11, kind: input, shape index: {}]
  %s12 = inlined_call_operand.vmem [shape: f32[2,1,32], index: 12, kind: input, shape index: {}]
  %s13 = inlined_call_operand.vmem [shape: bf16[2,32,32], index: 13, kind: input, shape index: {}]
  %s14 = inlined_call_operand.vmem [shape: f32[2,1,32], index: 14, kind: input, shape index: {}]
  %s15 = inlined_call_operand.vmem [shape: f32[2,1,32], index: 15, kind: input, shape index: {}]
  %s16 = inlined_call_operand.vmem [shape: f32[2,1,32], index: 16, kind: input, shape index: {}]
  %s17 = inlined_call_operand.vmem [shape: bf16[2,32,128], index: 17, kind: input, shape index: {}]
  %s18 = inlined_call_operand.vmem [shape: f32[2,1,128], index: 18, kind: input, shape index: {}]
  %s19 = inlined_call_operand.vmem [shape: bf16[2,128,32], index: 19, kind: input, shape index: {}]
  %s20 = inlined_call_operand.vmem [shape: f32[2,1,32], index: 20, kind: input, shape index: {}]
  %s21 = inlined_call_operand.hbm [shape: f32[16,32], index: 21, kind: output, shape index: {}]
  %s22 = sld [smem:[#allocation0]]
  $region94: #{vit_forward.1} parent=0
    _
  %s24 = ssub.s32 1, %s22
  %s25 = scalar_select 0, %s24, %s22
  $region1: #{vit_forward.1} parent=0
    #allocation2 [shape = 'u8[8192]{0}', space=vmem, size = 0x2000, scoped, tag = 'output window, operand 0, single buffered']
    #allocation3 [shape = 's32[1]{0}', space=sflag, size = 0x4, scoped, tag = 'scoped memory for vit_forward.1']
    %26 = vsyncpa [#allocation3], 0
    // Predicated region
    $region2: #{vit_forward.1} parent=1 // pred_check
      _
    $region3: #{vit_forward.1} parent=1 // pred_check_branch
      %28 = sbr.rel (0) target = $region5
    $region4: #{vit_forward.1} parent=1 // pred_region
      _
    $region5: #{vit_forward.1} parent=1 // pred_fallthru
      _
    // Predicated region
    $region6: #{vit_forward.1} parent=1 // pred_check
      _
    $region7: #{vit_forward.1} parent=1 // pred_check_branch
      %30 = sbr.rel (0) target = $region9
    $region8: #{vit_forward.1} parent=1 // pred_region
      _
    $region9: #{vit_forward.1} parent=1 // pred_fallthru
      _
    // Predicated region
    $region10: #{vit_forward.1} parent=1 // pred_check
      _
    $region11: #{vit_forward.1} parent=1 // pred_check_branch
      %32 = sbr.rel (0) target = $region13
    $region12: #{vit_forward.1} parent=1 // pred_region
      _
    $region13: #{vit_forward.1} parent=1 // pred_fallthru
      _
    // Predicated region
    $region14: #{vit_forward.1} parent=1 // pred_check
      _
    $region15: #{vit_forward.1} parent=1 // pred_check_branch
      %34 = sbr.rel (0) target = $region17
    $region16: #{vit_forward.1} parent=1 // pred_region
      _
    $region17: #{vit_forward.1} parent=1 // pred_fallthru
      _
    // Predicated region
    $region18: #{vit_forward.1} parent=1 // pred_check
      _
    $region19: #{vit_forward.1} parent=1 // pred_check_branch
      %36 = sbr.rel (0) target = $region21
    $region20: #{vit_forward.1} parent=1 // pred_region
      _
    $region21: #{vit_forward.1} parent=1 // pred_fallthru
      _
    // Predicated region
    $region22: #{vit_forward.1} parent=1 // pred_check
      _
    $region23: #{vit_forward.1} parent=1 // pred_check_branch
      %38 = sbr.rel (0) target = $region25
    $region24: #{vit_forward.1} parent=1 // pred_region
      _
    $region25: #{vit_forward.1} parent=1 // pred_fallthru
      _
    // Predicated region
    $region26: #{vit_forward.1} parent=1 // pred_check
      _
    $region27: #{vit_forward.1} parent=1 // pred_check_branch
      %40 = sbr.rel (0) target = $region29
    $region28: #{vit_forward.1} parent=1 // pred_region
      _
    $region29: #{vit_forward.1} parent=1 // pred_fallthru
      _
    // Predicated region
    $region30: #{vit_forward.1} parent=1 // pred_check
      _
    $region31: #{vit_forward.1} parent=1 // pred_check_branch
      %42 = sbr.rel (0) target = $region33
    $region32: #{vit_forward.1} parent=1 // pred_region
      _
    $region33: #{vit_forward.1} parent=1 // pred_fallthru
      _
    // Predicated region
    $region34: #{vit_forward.1} parent=1 // pred_check
      _
    $region35: #{vit_forward.1} parent=1 // pred_check_branch
      %44 = sbr.rel (0) target = $region37
    $region36: #{vit_forward.1} parent=1 // pred_region
      _
    $region37: #{vit_forward.1} parent=1 // pred_fallthru
      _
    // Predicated region
    $region38: #{vit_forward.1} parent=1 // pred_check
      _
    $region39: #{vit_forward.1} parent=1 // pred_check_branch
      %46 = sbr.rel (0) target = $region41
    $region40: #{vit_forward.1} parent=1 // pred_region
      _
    $region41: #{vit_forward.1} parent=1 // pred_fallthru
      _
    // Predicated region
    $region42: #{vit_forward.1} parent=1 // pred_check
      _
    $region43: #{vit_forward.1} parent=1 // pred_check_branch
      %48 = sbr.rel (0) target = $region45
    $region44: #{vit_forward.1} parent=1 // pred_region
      _
    $region45: #{vit_forward.1} parent=1 // pred_fallthru
      _
    // Predicated region
    $region46: #{vit_forward.1} parent=1 // pred_check
      _
    $region47: #{vit_forward.1} parent=1 // pred_check_branch
      %50 = sbr.rel (0) target = $region49
    $region48: #{vit_forward.1} parent=1 // pred_region
      _
    $region49: #{vit_forward.1} parent=1 // pred_fallthru
      _
    // Predicated region
    $region50: #{vit_forward.1} parent=1 // pred_check
      _
    $region51: #{vit_forward.1} parent=1 // pred_check_branch
      %52 = sbr.rel (0) target = $region53
    $region52: #{vit_forward.1} parent=1 // pred_region
      _
    $region53: #{vit_forward.1} parent=1 // pred_fallthru
      _
    // Predicated region
    $region54: #{vit_forward.1} parent=1 // pred_check
      _
    $region55: #{vit_forward.1} parent=1 // pred_check_branch
      %54 = sbr.rel (0) target = $region57
    $region56: #{vit_forward.1} parent=1 // pred_region
      _
    $region57: #{vit_forward.1} parent=1 // pred_fallthru
      _
    // Predicated region
    $region58: #{vit_forward.1} parent=1 // pred_check
      _
    $region59: #{vit_forward.1} parent=1 // pred_check_branch
      %56 = sbr.rel (0) target = $region61
    $region60: #{vit_forward.1} parent=1 // pred_region
      _
    $region61: #{vit_forward.1} parent=1 // pred_fallthru
      _
    // Predicated region
    $region62: #{vit_forward.1} parent=1 // pred_check
      _
    $region63: #{vit_forward.1} parent=1 // pred_check_branch
      %58 = sbr.rel (0) target = $region65
    $region64: #{vit_forward.1} parent=1 // pred_region
      _
    $region65: #{vit_forward.1} parent=1 // pred_fallthru
      _
    // Predicated region
    $region66: #{vit_forward.1} parent=1 // pred_check
      _
    $region67: #{vit_forward.1} parent=1 // pred_check_branch
      %60 = sbr.rel (0) target = $region69
    $region68: #{vit_forward.1} parent=1 // pred_region
      _
    $region69: #{vit_forward.1} parent=1 // pred_fallthru
      _
    // Predicated region
    $region70: #{vit_forward.1} parent=1 // pred_check
      _
    $region71: #{vit_forward.1} parent=1 // pred_check_branch
      %62 = sbr.rel (0) target = $region73
    $region72: #{vit_forward.1} parent=1 // pred_region
      _
    $region73: #{vit_forward.1} parent=1 // pred_fallthru
      _
    // Predicated region
    $region74: #{vit_forward.1} parent=1 // pred_check
      _
    $region75: #{vit_forward.1} parent=1 // pred_check_branch
      %64 = sbr.rel (0) target = $region77
    $region76: #{vit_forward.1} parent=1 // pred_region
      _
    $region77: #{vit_forward.1} parent=1 // pred_fallthru
      _
    // Predicated region
    $region78: #{vit_forward.1} parent=1 // pred_check
      _
    $region79: #{vit_forward.1} parent=1 // pred_check_branch
      %66 = sbr.rel (0) target = $region81
    $region80: #{vit_forward.1} parent=1 // pred_region
      _
    $region81: #{vit_forward.1} parent=1 // pred_fallthru
      _
    // Predicated region
    $region82: #{vit_forward.1} parent=1 // pred_check
      _
    $region83: #{vit_forward.1} parent=1 // pred_check_branch
      %68 = sbr.rel (0) target = $region85
    $region84: #{vit_forward.1} parent=1 // pred_region
      _
    $region85: #{vit_forward.1} parent=1 // pred_fallthru
      _
    %v70 = vld [vmem:[%s0] sm:$0xff]
    %v71 = vld [vmem:[%s0 + $0x8] sm:$0xff]
    %v72 = vld [vmem:[%s1] sm:$0xf]
    %v73 = vld [vmem:[%s1 + $0x4] sm:$0xf]
    %v74 = vld [vmem:[%s1 + $0x8] sm:$0xf]
    %v75 = vld [vmem:[%s1 + $0xc] sm:$0xf]
    %v76 = vpack.c.bf16 %v71, %v70
    %v77 = vld [vmem:[%s2] sm:$0xff]
    %v78 = vld [vmem:[%s2 + $0x8] sm:$0xff]
    %v83 = vunpack.c.l.b16 %v72
    %v84 = vunpack.c.l.b16 %v73
    %v85 = vunpack.c.l.b16 %v74
    %v86 = vunpack.c.l.b16 %v75
    %v87 = vpack.c.b16 %v84, %v83
    %v88 = vpack.c.b16 %v86, %v85
    %vm91 = vcmask 261120
    %v93 = vsel %vm91, %v76, 0
    %95 = vmatprep.subr.bf16.mxu0 0
    %96 = vmatpush1.bf16.msra.mxu0 0
    %97 = vmatprep.subr.bf16.mxu0 0
    %98 = vmatpush1.bf16.msra.mxu0 0
    %99 = vmatprep.subr.bf16.mxu0 0
    %100 = vmatpush1.bf16.msra.mxu0 0
    %101 = vmatprep.subr.bf16.mxu0 0
    %102 = vmatpush1.bf16.msra.mxu0 0
    %103 = vmatprep.subr.bf16.mxu0 0
    %104 = vmatpush1.bf16.msra.mxu0 0
    %105 = vmatprep.subr.bf16.mxu0 0
    %106 = vmatpush1.bf16.msra.mxu0 0
    %107 = vmatprep.subr.bf16.mxu0 0
    %108 = vmatpush1.bf16.msra.mxu0 %v88
    %109 = vmatprep.subr.bf16.mxu0 0
    %110 = vmatpush1.bf16.msra.mxu0 %v87
    %111 = vmatprep.subr.bf16.mxu0 0
    %112 = vmatpush2.bf16.msra.mxu0 0
    %113 = vmatprep.subr.bf16.mxu0 0
    %114 = vmatpush2.bf16.msra.mxu0 0
    %115 = vmatprep.subr.bf16.mxu0 0
    %116 = vmatpush2.bf16.msra.mxu0 0
    %117 = vmatprep.subr.bf16.mxu0 0
    %118 = vmatpush2.bf16.msra.mxu0 0
    %119 = vmatprep.subr.bf16.mxu0 0
    %120 = vmatpush2.bf16.msra.mxu0 0
    %121 = vmatprep.subr.bf16.mxu0 0
    %122 = vmatpush2.bf16.msra.mxu0 0
    %123 = vmatprep.subr.bf16.mxu0 0
    %124 = vmatpush2.bf16.msra.mxu0 0
    %125 = vmatprep.subr.bf16.mxu0 0
    %126 = vmatpush2.bf16.msra.mxu0 0
    %127 = vmatprep.mubr.bf16.mxu0 0
    %128 = vmatmul.mubr.bf16.gmra.mxu0 %v93
    %v129 = vpop.f32.mrf.mxu0
    %v130 = vadd.f32 %v77, %v129
    %v131 = vpop.f32.mrf.mxu0
    %v132 = vpop.f32.mrf.mxu0
    %v133 = vadd.f32 %v78, %v132
    %v134 = vpop.f32.mrf.mxu0
    %135 = vdwg.mxu0
    %v136 = vld [vmem:[%s3] sm:$0xff]
    %v137 = vld [vmem:[%s3 + $0x8] sm:$0xff]
    %v138 = vld [vmem:[%s4] sm:$0xff]
    %v139 = vld [vmem:[%s4 + $0x8] sm:$0xff]
    %v140 = vld [vmem:[%s4 + $0x10] sm:$0xff]
    %v141 = vld [vmem:[%s4 + $0x18] sm:$0xff]
    %v142 = vld [vmem:[%s4 + $0x20] sm:$0xff]
    %v143 = vld [vmem:[%s4 + $0x28] sm:$0xff]
    %v144 = vld [vmem:[%s4 + $0x30] sm:$0xff]
    %v145 = vld [vmem:[%s4 + $0x38] sm:$0xff]
    %v146 = vpack.c.bf16 %v139, %v138
    %v147 = vpack.c.bf16 %v141, %v140
    %v148 = vpack.c.bf16 %v143, %v142
    %v149 = vpack.c.bf16 %v145, %v144
    %v150 = vld [vmem:[%s5] sm:$0x1]
    %v151 = vld [vmem:[%s6] sm:$0x1]
    %v152 = vsel %vm91, %v130, 0.0
    %153 = vadd.xlane.f32.xlu0 %v152
    %v154 = vpop.xlane.xlu0 %153
    %v155 = vsel %vm91, %v133, 0.0
    %156 = vadd.xlane.f32.xlu0 %v155
    %v157 = vpop.xlane.xlu0 %156
    %v158 = vrcp.pop 32.0
    %v159 = vmul.f32 %v154, %v158
    %v160 = vmul.f32 %v157, %v158
    %v161 = vsub.f32 %v130, %v159
    %v162 = vsub.f32 %v133, %v160
    %v163 = vmul.f32 %v161, %v161
    %v164 = vmul.f32 %v162, %v162
    %v165 = vsel %vm91, %v163, 0.0
    %166 = vadd.xlane.f32.xlu0 %v165
    %v167 = vpop.xlane.xlu0 %166
    %v168 = vsel %vm91, %v164, 0.0
    %169 = vadd.xlane.f32.xlu0 %v168
    %v170 = vpop.xlane.xlu0 %169
    %v171 = vmul.f32 %v167, %v158
    %v172 = vmul.f32 %v170, %v158
    %v173 = vadd.f32 %v171, 1e-05
    %v174 = vadd.f32 %v172, 1e-05
    %v175 = vrsqrt.pop %v173
    %v176 = vrsqrt.pop %v174
    %v177 = vmul.f32 %v161, %v175
    %v178 = vmul.f32 %v162, %v176
    %v180 = vlaneseq
    %v181 = vshrl.u32 %v180, 7
    %v182 = vsub.s32 0, %v181
    %v183 = vrot.slane %v150, %v182
    %v185 = vmul.f32 %v177, %v183
    %v186 = vmul.f32 %v178, %v183
    %v188 = vlaneseq
    %v189 = vshrl.u32 %v188, 7
    %v190 = vsub.s32 0, %v189
    %v191 = vrot.slane %v151, %v190
    %v193 = vadd.f32 %v185, %v191
    %v194 = vadd.f32 %v186, %v191
    %v195 = vld [vmem:[%s7] sm:$0xf]
    %v196 = vld [vmem:[%s7 + $0x4] sm:$0xf]
    %v197 = vld [vmem:[%s7 + $0x8] sm:$0xf]
    %v198 = vld [vmem:[%s7 + $0xc] sm:$0xf]
    %v199 = vpack.c.bf16 %v194, %v193
    %v200 = vld [vmem:[%s8] sm:$0x1]
    %v202 = vlaneseq
    %v203 = vshrl.u32 %v202, 7
    %v204 = vsub.s32 0, %v203
    %v205 = vrot.slane %v200, %v204
    %v211 = vunpack.c.l.b16 %v195
    %v212 = vunpack.c.l.b16 %v196
    %v213 = vunpack.c.l.b16 %v197
    %v214 = vunpack.c.l.b16 %v198
    %v215 = vpack.c.b16 %v212, %v211
    %v216 = vpack.c.b16 %v214, %v213
    %v220 = vsel %vm91, %v199, 0
    %222 = vmatprep.subr.bf16.mxu0 0
    %223 = vmatpush1.bf16.msra.mxu0 0
    %224 = vmatprep.subr.bf16.mxu0 0
    %225 = vmatpush1.bf16.msra.mxu0 0
    %226 = vmatprep.subr.bf16.mxu0 0
    %227 = vmatpush1.bf16.msra.mxu0 0
    %228 = vmatprep.subr.bf16.mxu0 0
    %229 = vmatpush1.bf16.msra.mxu0 0
    %230 = vmatprep.subr.bf16.mxu0 0
    %231 = vmatpush1.bf16.msra.mxu0 0
    %232 = vmatprep.subr.bf16.mxu0 0
    %233 = vmatpush1.bf16.msra.mxu0 0
    %234 = vmatprep.subr.bf16.mxu0 0
    %235 = vmatpush1.bf16.msra.mxu0 %v216
    %236 = vmatprep.subr.bf16.mxu0 0
    %237 = vmatpush1.bf16.msra.mxu0 %v215
    %238 = vmatprep.subr.bf16.mxu0 0
    %239 = vmatpush2.bf16.msra.mxu0 0
    %240 = vmatprep.subr.bf16.mxu0 0
    %241 = vmatpush2.bf16.msra.mxu0 0
    %242 = vmatprep.subr.bf16.mxu0 0
    %243 = vmatpush2.bf16.msra.mxu0 0
    %244 = vmatprep.subr.bf16.mxu0 0
    %245 = vmatpush2.bf16.msra.mxu0 0
    %246 = vmatprep.subr.bf16.mxu0 0
    %247 = vmatpush2.bf16.msra.mxu0 0
    %248 = vmatprep.subr.bf16.mxu0 0
    %249 = vmatpush2.bf16.msra.mxu0 0
    %250 = vmatprep.subr.bf16.mxu0 0
    %251 = vmatpush2.bf16.msra.mxu0 0
    %252 = vmatprep.subr.bf16.mxu0 0
    %253 = vmatpush2.bf16.msra.mxu0 0
    %254 = vmatprep.mubr.bf16.mxu0 0
    %255 = vmatmul.mubr.bf16.gmra.mxu0 %v220
    %v256 = vpop.f32.mrf.mxu0
    %v257 = vadd.f32 %v205, %v256
    %v258 = vpop.f32.mrf.mxu0
    %v259 = vpop.f32.mrf.mxu0
    %v260 = vadd.f32 %v205, %v259
    %v261 = vpop.f32.mrf.mxu0
    %262 = vdwg.mxu0
    %v263 = vld [vmem:[%s9] sm:$0xf]
    %v264 = vld [vmem:[%s9 + $0x4] sm:$0xf]
    %v265 = vld [vmem:[%s9 + $0x8] sm:$0xf]
    %v266 = vld [vmem:[%s9 + $0xc] sm:$0xf]
    %v267 = vld [vmem:[%s10] sm:$0x1]
    %v269 = vlaneseq
    %v270 = vshrl.u32 %v269, 7
    %v271 = vsub.s32 0, %v270
    %v272 = vrot.slane %v267, %v271
    %v278 = vunpack.c.l.b16 %v263
    %v279 = vunpack.c.l.b16 %v264
    %v280 = vunpack.c.l.b16 %v265
    %v281 = vunpack.c.l.b16 %v266
    %v282 = vpack.c.b16 %v279, %v278
    %v283 = vpack.c.b16 %v281, %v280
    %286 = vmatprep.subr.bf16.mxu0 0
    %287 = vmatpush1.bf16.msra.mxu0 0
    %288 = vmatprep.subr.bf16.mxu0 0
    %289 = vmatpush1.bf16.msra.mxu0 0
    %290 = vmatprep.subr.bf16.mxu0 0
    %291 = vmatpush1.bf16.msra.mxu0 0
    %292 = vmatprep.subr.bf16.mxu0 0
    %293 = vmatpush1.bf16.msra.mxu0 0
    %294 = vmatprep.subr.bf16.mxu0 0
    %295 = vmatpush1.bf16.msra.mxu0 0
    %296 = vmatprep.subr.bf16.mxu0 0
    %297 = vmatpush1.bf16.msra.mxu0 0
    %298 = vmatprep.subr.bf16.mxu0 0
    %299 = vmatpush1.bf16.msra.mxu0 %v283
    %300 = vmatprep.subr.bf16.mxu0 0
    %301 = vmatpush1.bf16.msra.mxu0 %v282
    %302 = vmatprep.subr.bf16.mxu0 0
    %303 = vmatpush2.bf16.msra.mxu0 0
    %304 = vmatprep.subr.bf16.mxu0 0
    %305 = vmatpush2.bf16.msra.mxu0 0
    %306 = vmatprep.subr.bf16.mxu0 0
    %307 = vmatpush2.bf16.msra.mxu0 0
    %308 = vmatprep.subr.bf16.mxu0 0
    %309 = vmatpush2.bf16.msra.mxu0 0
    %310 = vmatprep.subr.bf16.mxu0 0
    %311 = vmatpush2.bf16.msra.mxu0 0
    %312 = vmatprep.subr.bf16.mxu0 0
    %313 = vmatpush2.bf16.msra.mxu0 0
    %314 = vmatprep.subr.bf16.mxu0 0
    %315 = vmatpush2.bf16.msra.mxu0 0
    %316 = vmatprep.subr.bf16.mxu0 0
    %317 = vmatpush2.bf16.msra.mxu0 0
    %318 = vmatprep.mubr.bf16.mxu0 0
    %319 = vmatmul.mubr.bf16.gmra.mxu0 %v220
    %v320 = vpop.f32.mrf.mxu0
    %v321 = vadd.f32 %v272, %v320
    %v322 = vpop.f32.mrf.mxu0
    %v323 = vpop.f32.mrf.mxu0
    %v324 = vadd.f32 %v272, %v323
    %v325 = vpop.f32.mrf.mxu0
    %326 = vdwg.mxu0
    %v327 = vld [vmem:[%s11] sm:$0xf]
    %v328 = vld [vmem:[%s11 + $0x4] sm:$0xf]
    %v329 = vld [vmem:[%s11 + $0x8] sm:$0xf]
    %v330 = vld [vmem:[%s11 + $0xc] sm:$0xf]
    %v331 = vld [vmem:[%s12] sm:$0x1]
    %v333 = vlaneseq
    %v334 = vshrl.u32 %v333, 7
    %v335 = vsub.s32 0, %v334
    %v336 = vrot.slane %v331, %v335
    %v342 = vunpack.c.l.b16 %v327
    %v343 = vunpack.c.l.b16 %v328
    %v344 = vunpack.c.l.b16 %v329
    %v345 = vunpack.c.l.b16 %v330
    %v346 = vpack.c.b16 %v343, %v342
    %v347 = vpack.c.b16 %v345, %v344
    %350 = vmatprep.subr.bf16.mxu0 0
    %351 = vmatpush1.bf16.msra.mxu0 0
    %352 = vmatprep.subr.bf16.mxu0 0
    %353 = vmatpush1.bf16.msra.mxu0 0
    %354 = vmatprep.subr.bf16.mxu0 0
    %355 = vmatpush1.bf16.msra.mxu0 0
    %356 = vmatprep.subr.bf16.mxu0 0
    %357 = vmatpush1.bf16.msra.mxu0 0
    %358 = vmatprep.subr.bf16.mxu0 0
    %359 = vmatpush1.bf16.msra.mxu0 0
    %360 = vmatprep.subr.bf16.mxu0 0
    %361 = vmatpush1.bf16.msra.mxu0 0
    %362 = vmatprep.subr.bf16.mxu0 0
    %363 = vmatpush1.bf16.msra.mxu0 %v347
    %364 = vmatprep.subr.bf16.mxu0 0
    %365 = vmatpush1.bf16.msra.mxu0 %v346
    %366 = vmatprep.subr.bf16.mxu0 0
    %367 = vmatpush2.bf16.msra.mxu0 0
    %368 = vmatprep.subr.bf16.mxu0 0
    %369 = vmatpush2.bf16.msra.mxu0 0
    %370 = vmatprep.subr.bf16.mxu0 0
    %371 = vmatpush2.bf16.msra.mxu0 0
    %372 = vmatprep.subr.bf16.mxu0 0
    %373 = vmatpush2.bf16.msra.mxu0 0
    %374 = vmatprep.subr.bf16.mxu0 0
    %375 = vmatpush2.bf16.msra.mxu0 0
    %376 = vmatprep.subr.bf16.mxu0 0
    %377 = vmatpush2.bf16.msra.mxu0 0
    %378 = vmatprep.subr.bf16.mxu0 0
    %379 = vmatpush2.bf16.msra.mxu0 0
    %380 = vmatprep.subr.bf16.mxu0 0
    %381 = vmatpush2.bf16.msra.mxu0 0
    %382 = vmatprep.mubr.bf16.mxu0 0
    %383 = vmatmul.mubr.bf16.gmra.mxu0 %v220
    %v384 = vpop.f32.mrf.mxu0
    %v385 = vadd.f32 %v336, %v384
    %v386 = vpop.f32.mrf.mxu0
    %v387 = vpop.f32.mrf.mxu0
    %v388 = vadd.f32 %v336, %v387
    %v389 = vpop.f32.mrf.mxu0
    %390 = vdwg.mxu0
    %v391 = vmul.f32 %v321, %v138
    %v392 = vmul.f32 %v324, %v139
    %v393 = vmul.f32 %v321, %v140
    %v394 = vmul.f32 %v324, %v141
    %v395 = vmul.f32 %v321, %v142
    %v396 = vmul.f32 %v324, %v143
    %v397 = vmul.f32 %v321, %v144
    %v398 = vmul.f32 %v324, %v145
    %v399 = vmul.f32 %v385, %v138
    %v400 = vmul.f32 %v388, %v139
    %v401 = vmul.f32 %v385, %v140
    %v402 = vmul.f32 %v388, %v141
    %v403 = vmul.f32 %v385, %v142
    %v404 = vmul.f32 %v388, %v143
    %v405 = vmul.f32 %v385, %v144
    %v406 = vmul.f32 %v388, %v145
    %v407 = vpack.c.bf16 %v260, %v257
    %v408 = vpack.c.bf16 %v392, %v391
    %v409 = vpack.c.bf16 %v394, %v393
    %v410 = vpack.c.bf16 %v396, %v395
    %v411 = vpack.c.bf16 %v398, %v397
    %v413 = vsel %vm91, %v407, 0
    %v416 = vsel %vm91, %v408, 0
    %v419 = vsel %vm91, %v409, 0
    %v422 = vsel %vm91, %v410, 0
    %v425 = vsel %vm91, %v411, 0
    %427 = vmatprep.subr.bf16.mxu0 0
    %428 = vmatpush1.bf16.xpose.msra.mxu0 0
    %429 = vmatprep.subr.bf16.mxu0 0
    %430 = vmatpush1.bf16.xpose.msra.mxu0 0
    %431 = vmatprep.subr.bf16.mxu0 0
    %432 = vmatpush1.bf16.xpose.msra.mxu0 0
    %433 = vmatprep.subr.bf16.mxu0 0
    %434 = vmatpush1.bf16.xpose.msra.mxu0 0
    %435 = vmatprep.subr.bf16.mxu0 0
    %436 = vmatpush1.bf16.xpose.msra.mxu0 %v425
    %437 = vmatprep.subr.bf16.mxu0 0
    %438 = vmatpush1.bf16.xpose.msra.mxu0 %v422
    %439 = vmatprep.subr.bf16.mxu0 0
    %440 = vmatpush1.bf16.xpose.msra.mxu0 %v419
    %441 = vmatprep.subr.bf16.mxu0 0
    %442 = vmatpush1.bf16.xpose.msra.mxu0 %v416
    %443 = vmatprep.subr.bf16.mxu0 0
    %444 = vmatpush2.bf16.xpose.msra.mxu0 0
    %445 = vmatprep.subr.bf16.mxu0 0
    %446 = vmatpush2.bf16.xpose.msra.mxu0 0
    %447 = vmatprep.subr.bf16.mxu0 0
    %448 = vmatpush2.bf16.xpose.msra.mxu0 0
    %449 = vmatprep.subr.bf16.mxu0 0
    %450 = vmatpush2.bf16.xpose.msra.mxu0 0
    %451 = vmatprep.subr.bf16.mxu0 0
    %452 = vmatpush2.bf16.xpose.msra.mxu0 0
    %453 = vmatprep.subr.bf16.mxu0 0
    %454 = vmatpush2.bf16.xpose.msra.mxu0 0
    %455 = vmatprep.subr.bf16.mxu0 0
    %456 = vmatpush2.bf16.xpose.msra.mxu0 0
    %457 = vmatprep.subr.bf16.mxu0 0
    %458 = vmatpush2.bf16.xpose.msra.mxu0 0
    %459 = vmatprep.mubr.bf16.mxu0 0
    %460 = vmatmul.mubr.bf16.gmra.mxu0 %v413
    %v461 = vpop.f32.mrf.mxu0
    %v462 = vadd.f32 %v136, %v461
    %v463 = vpop.f32.mrf.mxu0
    %v464 = vpop.f32.mrf.mxu0
    %v465 = vadd.f32 %v137, %v464
    %v466 = vpop.f32.mrf.mxu0
    %467 = vdwg.mxu0
    %vm468 = vcmask 523264
    %v469 = vsel %vm468, %v462, -inf
    %470 = vmax.xlane.f32.xlu0 %v469
    %v471 = vpop.xlane.xlu0 %470
    %v472 = vsel %vm468, %v465, -inf
    %473 = vmax.xlane.f32.xlu0 %v472
    %v474 = vpop.xlane.xlu0 %473
    %v475 = vsub.f32 %v462, %v471
    %v476 = vsub.f32 %v465, %v474
    %v477 = vmul.f32 %v475, 1.442695
    %v478 = vpow.pop %v477
    %v479 = vmul.f32 %v476, 1.442695
    %v480 = vpow.pop %v479
    %v481 = vpack.c.bf16 %v480, %v478
    %v482 = vpack.c.bf16 %v400, %v399
    %v483 = vpack.c.bf16 %v402, %v401
    %v484 = vpack.c.bf16 %v404, %v403
    %v485 = vpack.c.bf16 %v406, %v405
    %v487 = vsel %vm468, %v481, 0
    %489 = vmatprep.subr.bf16.mxu0 0
    %490 = vmatpush1.bf16.msra.mxu0 0
    %491 = vmatprep.subr.bf16.mxu0 0
    %492 = vmatpush1.bf16.msra.mxu0 0
    %493 = vmatprep.subr.bf16.mxu0 0
    %494 = vmatpush1.bf16.msra.mxu0 0
    %495 = vmatprep.subr.bf16.mxu0 0
    %496 = vmatpush1.bf16.msra.mxu0 0
    %497 = vmatprep.subr.bf16.mxu0 0
    %498 = vmatpush1.bf16.msra.mxu0 %v485
    %499 = vmatprep.subr.bf16.mxu0 0
    %500 = vmatpush1.bf16.msra.mxu0 %v484
    %501 = vmatprep.subr.bf16.mxu0 0
    %502 = vmatpush1.bf16.msra.mxu0 %v483
    %503 = vmatprep.subr.bf16.mxu0 0
    %504 = vmatpush1.bf16.msra.mxu0 %v482
    %505 = vmatprep.subr.bf16.mxu0 0
    %506 = vmatpush2.bf16.msra.mxu0 0
    %507 = vmatprep.subr.bf16.mxu0 0
    %508 = vmatpush2.bf16.msra.mxu0 0
    %509 = vmatprep.subr.bf16.mxu0 0
    %510 = vmatpush2.bf16.msra.mxu0 0
    %511 = vmatprep.subr.bf16.mxu0 0
    %512 = vmatpush2.bf16.msra.mxu0 0
    %513 = vmatprep.subr.bf16.mxu0 0
    %514 = vmatpush2.bf16.msra.mxu0 0
    %515 = vmatprep.subr.bf16.mxu0 0
    %516 = vmatpush2.bf16.msra.mxu0 0
    %517 = vmatprep.subr.bf16.mxu0 0
    %518 = vmatpush2.bf16.msra.mxu0 0
    %519 = vmatprep.subr.bf16.mxu0 0
    %520 = vmatpush2.bf16.msra.mxu0 0
    %521 = vmatprep.mubr.bf16.mxu0 0
    %522 = vmatmul.mubr.bf16.gmra.mxu0 %v487
    %v523 = vpop.f32.mrf.mxu0
    %v524 = vadd.f32 0.0, %v523
    %v525 = vpop.f32.mrf.mxu0
    %v526 = vpop.f32.mrf.mxu0
    %v527 = vadd.f32 0.0, %v526
    %v528 = vpop.f32.mrf.mxu0
    %529 = vdwg.mxu0
    %530 = vmatprep.subr.bf16.mxu0 0
    %531 = vmatpush1.bf16.msra.mxu0 0
    %532 = vmatprep.subr.bf16.mxu0 0
    %533 = vmatpush1.bf16.msra.mxu0 0
    %534 = vmatprep.subr.bf16.mxu0 0
    %535 = vmatpush1.bf16.msra.mxu0 0
    %536 = vmatprep.subr.bf16.mxu0 0
    %537 = vmatpush1.bf16.msra.mxu0 0
    %538 = vmatprep.subr.bf16.mxu0 0
    %539 = vmatpush1.bf16.msra.mxu0 %v149
    %540 = vmatprep.subr.bf16.mxu0 0
    %541 = vmatpush1.bf16.msra.mxu0 %v148
    %542 = vmatprep.subr.bf16.mxu0 0
    %543 = vmatpush1.bf16.msra.mxu0 %v147
    %544 = vmatprep.subr.bf16.mxu0 0
    %545 = vmatpush1.bf16.msra.mxu0 %v146
    %546 = vmatprep.subr.bf16.mxu0 0
    %547 = vmatpush2.bf16.msra.mxu0 0
    %548 = vmatprep.subr.bf16.mxu0 0
    %549 = vmatpush2.bf16.msra.mxu0 0
    %550 = vmatprep.subr.bf16.mxu0 0
    %551 = vmatpush2.bf16.msra.mxu0 0
    %552 = vmatprep.subr.bf16.mxu0 0
    %553 = vmatpush2.bf16.msra.mxu0 0
    %554 = vmatprep.subr.bf16.mxu0 0
    %555 = vmatpush2.bf16.msra.mxu0 0
    %556 = vmatprep.subr.bf16.mxu0 0
    %557 = vmatpush2.bf16.msra.mxu0 0
    %558 = vmatprep.subr.bf16.mxu0 0
    %559 = vmatpush2.bf16.msra.mxu0 0
    %560 = vmatprep.subr.bf16.mxu0 0
    %561 = vmatpush2.bf16.msra.mxu0 0
    %562 = vmatprep.mubr.bf16.mxu0 0
    %563 = vmatmul.mubr.bf16.gmra.mxu0 %v487
    %v564 = vpop.f32.mrf.mxu0
    %v565 = vadd.f32 0.0, %v564
    %v566 = vpop.f32.mrf.mxu0
    %v567 = vpop.f32.mrf.mxu0
    %v568 = vadd.f32 0.0, %v567
    %v569 = vpop.f32.mrf.mxu0
    %570 = vdwg.mxu0
    %v571 = vrcp.pop %v565
    %v572 = vrcp.pop %v568
    %v573 = vmul.f32 %v524, %v571
    %v574 = vmul.f32 %v527, %v572
    %v575 = vld [vmem:[%s13] sm:$0xf]
    %v576 = vld [vmem:[%s13 + $0x4] sm:$0xf]
    %v577 = vld [vmem:[%s13 + $0x8] sm:$0xf]
    %v578 = vld [vmem:[%s13 + $0xc] sm:$0xf]
    %v579 = vpack.c.bf16 %v574, %v573
    %v584 = vunpack.c.l.b16 %v575
    %v585 = vunpack.c.l.b16 %v576
    %v586 = vunpack.c.l.b16 %v577
    %v587 = vunpack.c.l.b16 %v578
    %v588 = vpack.c.b16 %v585, %v584
    %v589 = vpack.c.b16 %v587, %v586
    %v593 = vsel %vm91, %v579, 0
    %595 = vmatprep.subr.bf16.mxu0 0
    %596 = vmatpush1.bf16.msra.mxu0 0
    %597 = vmatprep.subr.bf16.mxu0 0
    %598 = vmatpush1.bf16.msra.mxu0 0
    %599 = vmatprep.subr.bf16.mxu0 0
    %600 = vmatpush1.bf16.msra.mxu0 0
    %601 = vmatprep.subr.bf16.mxu0 0
    %602 = vmatpush1.bf16.msra.mxu0 0
    %603 = vmatprep.subr.bf16.mxu0 0
    %604 = vmatpush1.bf16.msra.mxu0 0
    %605 = vmatprep.subr.bf16.mxu0 0
    %606 = vmatpush1.bf16.msra.mxu0 0
    %607 = vmatprep.subr.bf16.mxu0 0
    %608 = vmatpush1.bf16.msra.mxu0 %v589
    %609 = vmatprep.subr.bf16.mxu0 0
    %610 = vmatpush1.bf16.msra.mxu0 %v588
    %611 = vmatprep.subr.bf16.mxu0 0
    %612 = vmatpush2.bf16.msra.mxu0 0
    %613 = vmatprep.subr.bf16.mxu0 0
    %614 = vmatpush2.bf16.msra.mxu0 0
    %615 = vmatprep.subr.bf16.mxu0 0
    %616 = vmatpush2.bf16.msra.mxu0 0
    %617 = vmatprep.subr.bf16.mxu0 0
    %618 = vmatpush2.bf16.msra.mxu0 0
    %619 = vmatprep.subr.bf16.mxu0 0
    %620 = vmatpush2.bf16.msra.mxu0 0
    %621 = vmatprep.subr.bf16.mxu0 0
    %622 = vmatpush2.bf16.msra.mxu0 0
    %623 = vmatprep.subr.bf16.mxu0 0
    %624 = vmatpush2.bf16.msra.mxu0 0
    %625 = vmatprep.subr.bf16.mxu0 0
    %626 = vmatpush2.bf16.msra.mxu0 0
    %627 = vmatprep.mubr.bf16.mxu0 0
    %628 = vmatmul.mubr.bf16.gmra.mxu0 %v593
    %v629 = vpop.f32.mrf.mxu0
    %v630 = vadd.f32 0.0, %v629
    %v631 = vpop.f32.mrf.mxu0
    %v632 = vpop.f32.mrf.mxu0
    %v633 = vadd.f32 0.0, %v632
    %v634 = vpop.f32.mrf.mxu0
    %635 = vdwg.mxu0
    %v636 = vadd.f32 %v130, %v630
    %v637 = vadd.f32 %v133, %v633
    %v638 = vld [vmem:[%s14] sm:$0x1]
    %v640 = vlaneseq
    %v641 = vshrl.u32 %v640, 7
    %v642 = vsub.s32 0, %v641
    %v643 = vrot.slane %v638, %v642
    %v645 = vadd.f32 %v636, %v643
    %v646 = vadd.f32 %v637, %v643
    %v647 = vld [vmem:[%s15] sm:$0x1]
    %v648 = vld [vmem:[%s16] sm:$0x1]
    %v649 = vsel %vm91, %v645, 0.0
    %650 = vadd.xlane.f32.xlu0 %v649
    %v651 = vpop.xlane.xlu0 %650
    %v652 = vsel %vm91, %v646, 0.0
    %653 = vadd.xlane.f32.xlu0 %v652
    %v654 = vpop.xlane.xlu0 %653
    %v655 = vmul.f32 %v651, %v158
    %v656 = vmul.f32 %v654, %v158
    %v657 = vsub.f32 %v645, %v655
    %v658 = vsub.f32 %v646, %v656
    %v659 = vmul.f32 %v657, %v657
    %v660 = vmul.f32 %v658, %v658
    %v661 = vsel %vm91, %v659, 0.0
    %662 = vadd.xlane.f32.xlu0 %v661
    %v663 = vpop.xlane.xlu0 %662
    %v664 = vsel %vm91, %v660, 0.0
    %665 = vadd.xlane.f32.xlu0 %v664
    %v666 = vpop.xlane.xlu0 %665
    %v667 = vmul.f32 %v663, %v158
    %v668 = vmul.f32 %v666, %v158
    %v669 = vadd.f32 %v667, 1e-05
    %v670 = vadd.f32 %v668, 1e-05
    %v671 = vrsqrt.pop %v669
    %v672 = vrsqrt.pop %v670
    %v673 = vmul.f32 %v657, %v671
    %v674 = vmul.f32 %v658, %v672
    %v676 = vlaneseq
    %v677 = vshrl.u32 %v676, 7
    %v678 = vsub.s32 0, %v677
    %v679 = vrot.slane %v647, %v678
    %v681 = vmul.f32 %v673, %v679
    %v682 = vmul.f32 %v674, %v679
    %v684 = vlaneseq
    %v685 = vshrl.u32 %v684, 7
    %v686 = vsub.s32 0, %v685
    %v687 = vrot.slane %v648, %v686
    %v689 = vadd.f32 %v681, %v687
    %v690 = vadd.f32 %v682, %v687
    %v691 = vld [vmem:[%s17] sm:$0xf]
    %v692 = vld [vmem:[%s17 + $0x4] sm:$0xf]
    %v693 = vld [vmem:[%s17 + $0x8] sm:$0xf]
    %v694 = vld [vmem:[%s17 + $0xc] sm:$0xf]
    %v695 = vpack.c.bf16 %v690, %v689
    %v696 = vld [vmem:[%s18] sm:$0x1]
    %v698 = vlaneseq
    %v699 = vshrl.u32 %v698, 7
    %v700 = vsub.s32 0, %v699
    %v701 = vrot.slane %v696, %v700
    %v707 = vunpack.c.l.b16 %v691
    %v708 = vunpack.c.l.b16 %v692
    %v709 = vunpack.c.l.b16 %v693
    %v710 = vunpack.c.l.b16 %v694
    %v711 = vpack.c.b16 %v708, %v707
    %v712 = vpack.c.b16 %v710, %v709
    %v716 = vsel %vm91, %v695, 0
    %718 = vmatprep.subr.bf16.mxu0 0
    %719 = vmatpush1.bf16.msra.mxu0 0
    %720 = vmatprep.subr.bf16.mxu0 0
    %721 = vmatpush1.bf16.msra.mxu0 0
    %722 = vmatprep.subr.bf16.mxu0 0
    %723 = vmatpush1.bf16.msra.mxu0 0
    %724 = vmatprep.subr.bf16.mxu0 0
    %725 = vmatpush1.bf16.msra.mxu0 0
    %726 = vmatprep.subr.bf16.mxu0 0
    %727 = vmatpush1.bf16.msra.mxu0 0
    %728 = vmatprep.subr.bf16.mxu0 0
    %729 = vmatpush1.bf16.msra.mxu0 0
    %730 = vmatprep.subr.bf16.mxu0 0
    %731 = vmatpush1.bf16.msra.mxu0 %v712
    %732 = vmatprep.subr.bf16.mxu0 0
    %733 = vmatpush1.bf16.msra.mxu0 %v711
    %734 = vmatprep.subr.bf16.mxu0 0
    %735 = vmatpush2.bf16.msra.mxu0 0
    %736 = vmatprep.subr.bf16.mxu0 0
    %737 = vmatpush2.bf16.msra.mxu0 0
    %738 = vmatprep.subr.bf16.mxu0 0
    %739 = vmatpush2.bf16.msra.mxu0 0
    %740 = vmatprep.subr.bf16.mxu0 0
    %741 = vmatpush2.bf16.msra.mxu0 0
    %742 = vmatprep.subr.bf16.mxu0 0
    %743 = vmatpush2.bf16.msra.mxu0 0
    %744 = vmatprep.subr.bf16.mxu0 0
    %745 = vmatpush2.bf16.msra.mxu0 0
    %746 = vmatprep.subr.bf16.mxu0 0
    %747 = vmatpush2.bf16.msra.mxu0 0
    %748 = vmatprep.subr.bf16.mxu0 0
    %749 = vmatpush2.bf16.msra.mxu0 0
    %750 = vmatprep.mubr.bf16.mxu0 0
    %751 = vmatmul.mubr.bf16.gmra.mxu0 %v716
    %v752 = vpop.f32.mrf.mxu0
    %v753 = vadd.f32 %v701, %v752
    %v754 = vpop.f32.mrf.mxu0
    %v755 = vpop.f32.mrf.mxu0
    %v756 = vadd.f32 %v701, %v755
    %v757 = vpop.f32.mrf.mxu0
    %758 = vdwg.mxu0
    %v759 = vmul.f32 %v753, 0.5
    %v760 = vmul.f32 %v756, 0.5
    %v761 = vmul.f32 %v753, 0.044715
    %v762 = vmul.f32 %v756, 0.044715
    %v763 = vmul.f32 %v761, %v753
    %v764 = vmul.f32 %v762, %v756
    %v765 = vmul.f32 %v763, %v753
    %v766 = vmul.f32 %v764, %v756
    %v767 = vadd.f32 %v753, %v765
    %v768 = vadd.f32 %v756, %v766
    %v769 = vmul.f32 %v767, 0.7978846
    %v770 = vmul.f32 %v768, 0.7978846
    %v771 = vtanh.pop %v769
    %v772 = vtanh.pop %v770
    %v773 = vadd.f32 %v771, 1.0
    %v774 = vadd.f32 %v772, 1.0
    %v775 = vmul.f32 %v759, %v773
    %v776 = vmul.f32 %v760, %v774
    %v777 = vld [vmem:[%s19] sm:$0xf]
    %v778 = vld [vmem:[%s19 + $0x4] sm:$0xf]
    %v779 = vld [vmem:[%s19 + $0x8] sm:$0xf]
    %v780 = vld [vmem:[%s19 + $0xc] sm:$0xf]
    %v781 = vld [vmem:[%s19 + $0x10] sm:$0xf]
    %v782 = vld [vmem:[%s19 + $0x14] sm:$0xf]
    %v783 = vld [vmem:[%s19 + $0x18] sm:$0xf]
    %v784 = vld [vmem:[%s19 + $0x1c] sm:$0xf]
    %v785 = vld [vmem:[%s19 + $0x20] sm:$0xf]
    %v786 = vld [vmem:[%s19 + $0x24] sm:$0xf]
    %v787 = vld [vmem:[%s19 + $0x28] sm:$0xf]
    %v788 = vld [vmem:[%s19 + $0x2c] sm:$0xf]
    %v789 = vld [vmem:[%s19 + $0x30] sm:$0xf]
    %v790 = vld [vmem:[%s19 + $0x34] sm:$0xf]
    %v791 = vld [vmem:[%s19 + $0x38] sm:$0xf]
    %v792 = vld [vmem:[%s19 + $0x3c] sm:$0xf]
    %v793 = vpack.c.bf16 %v776, %v775
    %v810 = vunpack.c.l.b16 %v777
    %v811 = vunpack.c.l.b16 %v778
    %v812 = vunpack.c.l.b16 %v779
    %v813 = vunpack.c.l.b16 %v780
    %v814 = vunpack.c.l.b16 %v781
    %v815 = vunpack.c.l.b16 %v782
    %v816 = vunpack.c.l.b16 %v783
    %v817 = vunpack.c.l.b16 %v784
    %v818 = vunpack.c.l.b16 %v785
    %v819 = vunpack.c.l.b16 %v786
    %v820 = vunpack.c.l.b16 %v787
    %v821 = vunpack.c.l.b16 %v788
    %v822 = vunpack.c.l.b16 %v789
    %v823 = vunpack.c.l.b16 %v790
    %v824 = vunpack.c.l.b16 %v791
    %v825 = vunpack.c.l.b16 %v792
    %v826 = vpack.c.b16 %v811, %v810
    %v827 = vpack.c.b16 %v813, %v812
    %v828 = vpack.c.b16 %v815, %v814
    %v829 = vpack.c.b16 %v817, %v816
    %v830 = vpack.c.b16 %v819, %v818
    %v831 = vpack.c.b16 %v821, %v820
    %v832 = vpack.c.b16 %v823, %v822
    %v833 = vpack.c.b16 %v825, %v824
    %842 = vmatprep.subr.bf16.mxu0 0
    %843 = vmatpush1.bf16.msra.mxu0 %v833
    %844 = vmatprep.subr.bf16.mxu0 0
    %845 = vmatpush1.bf16.msra.mxu0 %v832
    %846 = vmatprep.subr.bf16.mxu0 0
    %847 = vmatpush1.bf16.msra.mxu0 %v831
    %848 = vmatprep.subr.bf16.mxu0 0
    %849 = vmatpush1.bf16.msra.mxu0 %v830
    %850 = vmatprep.subr.bf16.mxu0 0
    %851 = vmatpush1.bf16.msra.mxu0 %v829
    %852 = vmatprep.subr.bf16.mxu0 0
    %853 = vmatpush1.bf16.msra.mxu0 %v828
    %854 = vmatprep.subr.bf16.mxu0 0
    %855 = vmatpush1.bf16.msra.mxu0 %v827
    %856 = vmatprep.subr.bf16.mxu0 0
    %857 = vmatpush1.bf16.msra.mxu0 %v826
    %858 = vmatprep.subr.bf16.mxu0 0
    %859 = vmatpush2.bf16.msra.mxu0 0
    %860 = vmatprep.subr.bf16.mxu0 0
    %861 = vmatpush2.bf16.msra.mxu0 0
    %862 = vmatprep.subr.bf16.mxu0 0
    %863 = vmatpush2.bf16.msra.mxu0 0
    %864 = vmatprep.subr.bf16.mxu0 0
    %865 = vmatpush2.bf16.msra.mxu0 0
    %866 = vmatprep.subr.bf16.mxu0 0
    %867 = vmatpush2.bf16.msra.mxu0 0
    %868 = vmatprep.subr.bf16.mxu0 0
    %869 = vmatpush2.bf16.msra.mxu0 0
    %870 = vmatprep.subr.bf16.mxu0 0
    %871 = vmatpush2.bf16.msra.mxu0 0
    %872 = vmatprep.subr.bf16.mxu0 0
    %873 = vmatpush2.bf16.msra.mxu0 0
    %874 = vmatprep.mubr.bf16.mxu0 0
    %875 = vmatmul.mubr.bf16.gmra.mxu0 %v793
    %v876 = vpop.f32.mrf.mxu0
    %v877 = vadd.f32 0.0, %v876
    %v878 = vpop.f32.mrf.mxu0
    %v879 = vpop.f32.mrf.mxu0
    %v880 = vadd.f32 0.0, %v879
    %v881 = vpop.f32.mrf.mxu0
    %882 = vdwg.mxu0
    %v883 = vadd.f32 %v645, %v877
    %v884 = vadd.f32 %v646, %v880
    %v885 = vld [vmem:[%s20] sm:$0x1]
    %v887 = vlaneseq
    %v888 = vshrl.u32 %v887, 7
    %v889 = vsub.s32 0, %v888
    %v890 = vrot.slane %v885, %v889
    %v892 = vadd.f32 %v883, %v890
    %v893 = vadd.f32 %v884, %v890
    %s894 = scalar_lea.vmem %s5, 1
    %v895 = vld [vmem:[%s894] sm:$0x1]
    %s896 = scalar_lea.vmem %s6, 1
    %v897 = vld [vmem:[%s896] sm:$0x1]
    %v898 = vsel %vm91, %v892, 0.0
    %899 = vadd.xlane.f32.xlu0 %v898
    %v900 = vpop.xlane.xlu0 %899
    %v901 = vsel %vm91, %v893, 0.0
    %902 = vadd.xlane.f32.xlu0 %v901
    %v903 = vpop.xlane.xlu0 %902
    %v904 = vmul.f32 %v900, %v158
    %v905 = vmul.f32 %v903, %v158
    %v906 = vsub.f32 %v892, %v904
    %v907 = vsub.f32 %v893, %v905
    %v908 = vmul.f32 %v906, %v906
    %v909 = vmul.f32 %v907, %v907
    %v910 = vsel %vm91, %v908, 0.0
    %911 = vadd.xlane.f32.xlu0 %v910
    %v912 = vpop.xlane.xlu0 %911
    %v913 = vsel %vm91, %v909, 0.0
    %914 = vadd.xlane.f32.xlu0 %v913
    %v915 = vpop.xlane.xlu0 %914
    %v916 = vmul.f32 %v912, %v158
    %v917 = vmul.f32 %v915, %v158
    %v918 = vadd.f32 %v916, 1e-05
    %v919 = vadd.f32 %v917, 1e-05
    %v920 = vrsqrt.pop %v918
    %v921 = vrsqrt.pop %v919
    %v922 = vmul.f32 %v906, %v920
    %v923 = vmul.f32 %v907, %v921
    %v925 = vlaneseq
    %v926 = vshrl.u32 %v925, 7
    %v927 = vsub.s32 0, %v926
    %v928 = vrot.slane %v895, %v927
    %v930 = vmul.f32 %v922, %v928
    %v931 = vmul.f32 %v923, %v928
    %v933 = vlaneseq
    %v934 = vshrl.u32 %v933, 7
    %v935 = vsub.s32 0, %v934
    %v936 = vrot.slane %v897, %v935
    %v938 = vadd.f32 %v930, %v936
    %v939 = vadd.f32 %v931, %v936
    %s940 = scalar_lea.vmem %s7, 16
    %v941 = vld [vmem:[%s940] sm:$0xf]
    %v942 = vld [vmem:[%s940 + $0x4] sm:$0xf]
    %v943 = vld [vmem:[%s940 + $0x8] sm:$0xf]
    %v944 = vld [vmem:[%s940 + $0xc] sm:$0xf]
    %v945 = vpack.c.bf16 %v939, %v938
    %s946 = scalar_lea.vmem %s8, 1
    %v947 = vld [vmem:[%s946] sm:$0x1]
    %v949 = vlaneseq
    %v950 = vshrl.u32 %v949, 7
    %v951 = vsub.s32 0, %v950
    %v952 = vrot.slane %v947, %v951
    %v958 = vunpack.c.l.b16 %v941
    %v959 = vunpack.c.l.b16 %v942
    %v960 = vunpack.c.l.b16 %v943
    %v961 = vunpack.c.l.b16 %v944
    %v962 = vpack.c.b16 %v959, %v958
    %v963 = vpack.c.b16 %v961, %v960
    %v967 = vsel %vm91, %v945, 0
    %969 = vmatprep.subr.bf16.mxu0 0
    %970 = vmatpush1.bf16.msra.mxu0 0
    %971 = vmatprep.subr.bf16.mxu0 0
    %972 = vmatpush1.bf16.msra.mxu0 0
    %973 = vmatprep.subr.bf16.mxu0 0
    %974 = vmatpush1.bf16.msra.mxu0 0
    %975 = vmatprep.subr.bf16.mxu0 0
    %976 = vmatpush1.bf16.msra.mxu0 0
    %977 = vmatprep.subr.bf16.mxu0 0
    %978 = vmatpush1.bf16.msra.mxu0 0
    %979 = vmatprep.subr.bf16.mxu0 0
    %980 = vmatpush1.bf16.msra.mxu0 0
    %981 = vmatprep.subr.bf16.mxu0 0
    %982 = vmatpush1.bf16.msra.mxu0 %v963
    %983 = vmatprep.subr.bf16.mxu0 0
    %984 = vmatpush1.bf16.msra.mxu0 %v962
    %985 = vmatprep.subr.bf16.mxu0 0
    %986 = vmatpush2.bf16.msra.mxu0 0
    %987 = vmatprep.subr.bf16.mxu0 0
    %988 = vmatpush2.bf16.msra.mxu0 0
    %989 = vmatprep.subr.bf16.mxu0 0
    %990 = vmatpush2.bf16.msra.mxu0 0
    %991 = vmatprep.subr.bf16.mxu0 0
    %992 = vmatpush2.bf16.msra.mxu0 0
    %993 = vmatprep.subr.bf16.mxu0 0
    %994 = vmatpush2.bf16.msra.mxu0 0
    %995 = vmatprep.subr.bf16.mxu0 0
    %996 = vmatpush2.bf16.msra.mxu0 0
    %997 = vmatprep.subr.bf16.mxu0 0
    %998 = vmatpush2.bf16.msra.mxu0 0
    %999 = vmatprep.subr.bf16.mxu0 0
    %1000 = vmatpush2.bf16.msra.mxu0 0
    %1001 = vmatprep.mubr.bf16.mxu0 0
    %1002 = vmatmul.mubr.bf16.gmra.mxu0 %v967
    %v1003 = vpop.f32.mrf.mxu0
    %v1004 = vadd.f32 %v952, %v1003
    %v1005 = vpop.f32.mrf.mxu0
    %v1006 = vpop.f32.mrf.mxu0
    %v1007 = vadd.f32 %v952, %v1006
    %v1008 = vpop.f32.mrf.mxu0
    %1009 = vdwg.mxu0
    %s1010 = scalar_lea.vmem %s9, 16
    %v1011 = vld [vmem:[%s1010] sm:$0xf]
    %v1012 = vld [vmem:[%s1010 + $0x4] sm:$0xf]
    %v1013 = vld [vmem:[%s1010 + $0x8] sm:$0xf]
    %v1014 = vld [vmem:[%s1010 + $0xc] sm:$0xf]
    %s1015 = scalar_lea.vmem %s10, 1
    %v1016 = vld [vmem:[%s1015] sm:$0x1]
    %v1018 = vlaneseq
    %v1019 = vshrl.u32 %v1018, 7
    %v1020 = vsub.s32 0, %v1019
    %v1021 = vrot.slane %v1016, %v1020
    %v1027 = vunpack.c.l.b16 %v1011
    %v1028 = vunpack.c.l.b16 %v1012
    %v1029 = vunpack.c.l.b16 %v1013
    %v1030 = vunpack.c.l.b16 %v1014
    %v1031 = vpack.c.b16 %v1028, %v1027
    %v1032 = vpack.c.b16 %v1030, %v1029
    %1035 = vmatprep.subr.bf16.mxu0 0
    %1036 = vmatpush1.bf16.msra.mxu0 0
    %1037 = vmatprep.subr.bf16.mxu0 0
    %1038 = vmatpush1.bf16.msra.mxu0 0
    %1039 = vmatprep.subr.bf16.mxu0 0
    %1040 = vmatpush1.bf16.msra.mxu0 0
    %1041 = vmatprep.subr.bf16.mxu0 0
    %1042 = vmatpush1.bf16.msra.mxu0 0
    %1043 = vmatprep.subr.bf16.mxu0 0
    %1044 = vmatpush1.bf16.msra.mxu0 0
    %1045 = vmatprep.subr.bf16.mxu0 0
    %1046 = vmatpush1.bf16.msra.mxu0 0
    %1047 = vmatprep.subr.bf16.mxu0 0
    %1048 = vmatpush1.bf16.msra.mxu0 %v1032
    %1049 = vmatprep.subr.bf16.mxu0 0
    %1050 = vmatpush1.bf16.msra.mxu0 %v1031
    %1051 = vmatprep.subr.bf16.mxu0 0
    %1052 = vmatpush2.bf16.msra.mxu0 0
    %1053 = vmatprep.subr.bf16.mxu0 0
    %1054 = vmatpush2.bf16.msra.mxu0 0
    %1055 = vmatprep.subr.bf16.mxu0 0
    %1056 = vmatpush2.bf16.msra.mxu0 0
    %1057 = vmatprep.subr.bf16.mxu0 0
    %1058 = vmatpush2.bf16.msra.mxu0 0
    %1059 = vmatprep.subr.bf16.mxu0 0
    %1060 = vmatpush2.bf16.msra.mxu0 0
    %1061 = vmatprep.subr.bf16.mxu0 0
    %1062 = vmatpush2.bf16.msra.mxu0 0
    %1063 = vmatprep.subr.bf16.mxu0 0
    %1064 = vmatpush2.bf16.msra.mxu0 0
    %1065 = vmatprep.subr.bf16.mxu0 0
    %1066 = vmatpush2.bf16.msra.mxu0 0
    %1067 = vmatprep.mubr.bf16.mxu0 0
    %1068 = vmatmul.mubr.bf16.gmra.mxu0 %v967
    %v1069 = vpop.f32.mrf.mxu0
    %v1070 = vadd.f32 %v1021, %v1069
    %v1071 = vpop.f32.mrf.mxu0
    %v1072 = vpop.f32.mrf.mxu0
    %v1073 = vadd.f32 %v1021, %v1072
    %v1074 = vpop.f32.mrf.mxu0
    %1075 = vdwg.mxu0
    %s1076 = scalar_lea.vmem %s11, 16
    %v1077 = vld [vmem:[%s1076] sm:$0xf]
    %v1078 = vld [vmem:[%s1076 + $0x4] sm:$0xf]
    %v1079 = vld [vmem:[%s1076 + $0x8] sm:$0xf]
    %v1080 = vld [vmem:[%s1076 + $0xc] sm:$0xf]
    %s1081 = scalar_lea.vmem %s12, 1
    %v1082 = vld [vmem:[%s1081] sm:$0x1]
    %v1084 = vlaneseq
    %v1085 = vshrl.u32 %v1084, 7
    %v1086 = vsub.s32 0, %v1085
    %v1087 = vrot.slane %v1082, %v1086
    %v1093 = vunpack.c.l.b16 %v1077
    %v1094 = vunpack.c.l.b16 %v1078
    %v1095 = vunpack.c.l.b16 %v1079
    %v1096 = vunpack.c.l.b16 %v1080
    %v1097 = vpack.c.b16 %v1094, %v1093
    %v1098 = vpack.c.b16 %v1096, %v1095
    %1101 = vmatprep.subr.bf16.mxu0 0
    %1102 = vmatpush1.bf16.msra.mxu0 0
    %1103 = vmatprep.subr.bf16.mxu0 0
    %1104 = vmatpush1.bf16.msra.mxu0 0
    %1105 = vmatprep.subr.bf16.mxu0 0
    %1106 = vmatpush1.bf16.msra.mxu0 0
    %1107 = vmatprep.subr.bf16.mxu0 0
    %1108 = vmatpush1.bf16.msra.mxu0 0
    %1109 = vmatprep.subr.bf16.mxu0 0
    %1110 = vmatpush1.bf16.msra.mxu0 0
    %1111 = vmatprep.subr.bf16.mxu0 0
    %1112 = vmatpush1.bf16.msra.mxu0 0
    %1113 = vmatprep.subr.bf16.mxu0 0
    %1114 = vmatpush1.bf16.msra.mxu0 %v1098
    %1115 = vmatprep.subr.bf16.mxu0 0
    %1116 = vmatpush1.bf16.msra.mxu0 %v1097
    %1117 = vmatprep.subr.bf16.mxu0 0
    %1118 = vmatpush2.bf16.msra.mxu0 0
    %1119 = vmatprep.subr.bf16.mxu0 0
    %1120 = vmatpush2.bf16.msra.mxu0 0
    %1121 = vmatprep.subr.bf16.mxu0 0
    %1122 = vmatpush2.bf16.msra.mxu0 0
    %1123 = vmatprep.subr.bf16.mxu0 0
    %1124 = vmatpush2.bf16.msra.mxu0 0
    %1125 = vmatprep.subr.bf16.mxu0 0
    %1126 = vmatpush2.bf16.msra.mxu0 0
    %1127 = vmatprep.subr.bf16.mxu0 0
    %1128 = vmatpush2.bf16.msra.mxu0 0
    %1129 = vmatprep.subr.bf16.mxu0 0
    %1130 = vmatpush2.bf16.msra.mxu0 0
    %1131 = vmatprep.subr.bf16.mxu0 0
    %1132 = vmatpush2.bf16.msra.mxu0 0
    %1133 = vmatprep.mubr.bf16.mxu0 0
    %1134 = vmatmul.mubr.bf16.gmra.mxu0 %v967
    %v1135 = vpop.f32.mrf.mxu0
    %v1136 = vadd.f32 %v1087, %v1135
    %v1137 = vpop.f32.mrf.mxu0
    %v1138 = vpop.f32.mrf.mxu0
    %v1139 = vadd.f32 %v1087, %v1138
    %v1140 = vpop.f32.mrf.mxu0
    %1141 = vdwg.mxu0
    %v1142 = vmul.f32 %v1070, %v138
    %v1143 = vmul.f32 %v1073, %v139
    %v1144 = vmul.f32 %v1070, %v140
    %v1145 = vmul.f32 %v1073, %v141
    %v1146 = vmul.f32 %v1070, %v142
    %v1147 = vmul.f32 %v1073, %v143
    %v1148 = vmul.f32 %v1070, %v144
    %v1149 = vmul.f32 %v1073, %v145
    %v1150 = vmul.f32 %v1136, %v138
    %v1151 = vmul.f32 %v1139, %v139
    %v1152 = vmul.f32 %v1136, %v140
    %v1153 = vmul.f32 %v1139, %v141
    %v1154 = vmul.f32 %v1136, %v142
    %v1155 = vmul.f32 %v1139, %v143
    %v1156 = vmul.f32 %v1136, %v144
    %v1157 = vmul.f32 %v1139, %v145
    %v1158 = vpack.c.bf16 %v1007, %v1004
    %v1159 = vpack.c.bf16 %v1143, %v1142
    %v1160 = vpack.c.bf16 %v1145, %v1144
    %v1161 = vpack.c.bf16 %v1147, %v1146
    %v1162 = vpack.c.bf16 %v1149, %v1148
    %v1164 = vsel %vm91, %v1158, 0
    %v1167 = vsel %vm91, %v1159, 0
    %v1170 = vsel %vm91, %v1160, 0
    %v1173 = vsel %vm91, %v1161, 0
    %v1176 = vsel %vm91, %v1162, 0
    %1178 = vmatprep.subr.bf16.mxu0 0
    %1179 = vmatpush1.bf16.xpose.msra.mxu0 0
    %1180 = vmatprep.subr.bf16.mxu0 0
    %1181 = vmatpush1.bf16.xpose.msra.mxu0 0
    %1182 = vmatprep.subr.bf16.mxu0 0
    %1183 = vmatpush1.bf16.xpose.msra.mxu0 0
    %1184 = vmatprep.subr.bf16.mxu0 0
    %1185 = vmatpush1.bf16.xpose.msra.mxu0 0
    %1186 = vmatprep.subr.bf16.mxu0 0
    %1187 = vmatpush1.bf16.xpose.msra.mxu0 %v1176
    %1188 = vmatprep.subr.bf16.mxu0 0
    %1189 = vmatpush1.bf16.xpose.msra.mxu0 %v1173
    %1190 = vmatprep.subr.bf16.mxu0 0
    %1191 = vmatpush1.bf16.xpose.msra.mxu0 %v1170
    %1192 = vmatprep.subr.bf16.mxu0 0
    %1193 = vmatpush1.bf16.xpose.msra.mxu0 %v1167
    %1194 = vmatprep.subr.bf16.mxu0 0
    %1195 = vmatpush2.bf16.xpose.msra.mxu0 0
    %1196 = vmatprep.subr.bf16.mxu0 0
    %1197 = vmatpush2.bf16.xpose.msra.mxu0 0
    %1198 = vmatprep.subr.bf16.mxu0 0
    %1199 = vmatpush2.bf16.xpose.msra.mxu0 0
    %1200 = vmatprep.subr.bf16.mxu0 0
    %1201 = vmatpush2.bf16.xpose.msra.mxu0 0
    %1202 = vmatprep.subr.bf16.mxu0 0
    %1203 = vmatpush2.bf16.xpose.msra.mxu0 0
    %1204 = vmatprep.subr.bf16.mxu0 0
    %1205 = vmatpush2.bf16.xpose.msra.mxu0 0
    %1206 = vmatprep.subr.bf16.mxu0 0
    %1207 = vmatpush2.bf16.xpose.msra.mxu0 0
    %1208 = vmatprep.subr.bf16.mxu0 0
    %1209 = vmatpush2.bf16.xpose.msra.mxu0 0
    %1210 = vmatprep.mubr.bf16.mxu0 0
    %1211 = vmatmul.mubr.bf16.gmra.mxu0 %v1164
    %v1212 = vpop.f32.mrf.mxu0
    %v1213 = vadd.f32 %v136, %v1212
    %v1214 = vpop.f32.mrf.mxu0
    %v1215 = vpop.f32.mrf.mxu0
    %v1216 = vadd.f32 %v137, %v1215
    %v1217 = vpop.f32.mrf.mxu0
    %1218 = vdwg.mxu0
    %v1219 = vsel %vm468, %v1213, -inf
    %1220 = vmax.xlane.f32.xlu0 %v1219
    %v1221 = vpop.xlane.xlu0 %1220
    %v1222 = vsel %vm468, %v1216, -inf
    %1223 = vmax.xlane.f32.xlu0 %v1222
    %v1224 = vpop.xlane.xlu0 %1223
    %v1225 = vsub.f32 %v1213, %v1221
    %v1226 = vsub.f32 %v1216, %v1224
    %v1227 = vmul.f32 %v1225, 1.442695
    %v1228 = vpow.pop %v1227
    %v1229 = vmul.f32 %v1226, 1.442695
    %v1230 = vpow.pop %v1229
    %v1231 = vpack.c.bf16 %v1230, %v1228
    %v1232 = vpack.c.bf16 %v1151, %v1150
    %v1233 = vpack.c.bf16 %v1153, %v1152
    %v1234 = vpack.c.bf16 %v1155, %v1154
    %v1235 = vpack.c.bf16 %v1157, %v1156
    %v1237 = vsel %vm468, %v1231, 0
    %1239 = vmatprep.subr.bf16.mxu0 0
    %1240 = vmatpush1.bf16.msra.mxu0 0
    %1241 = vmatprep.subr.bf16.mxu0 0
    %1242 = vmatpush1.bf16.msra.mxu0 0
    %1243 = vmatprep.subr.bf16.mxu0 0
    %1244 = vmatpush1.bf16.msra.mxu0 0
    %1245 = vmatprep.subr.bf16.mxu0 0
    %1246 = vmatpush1.bf16.msra.mxu0 0
    %1247 = vmatprep.subr.bf16.mxu0 0
    %1248 = vmatpush1.bf16.msra.mxu0 %v1235
    %1249 = vmatprep.subr.bf16.mxu0 0
    %1250 = vmatpush1.bf16.msra.mxu0 %v1234
    %1251 = vmatprep.subr.bf16.mxu0 0
    %1252 = vmatpush1.bf16.msra.mxu0 %v1233
    %1253 = vmatprep.subr.bf16.mxu0 0
    %1254 = vmatpush1.bf16.msra.mxu0 %v1232
    %1255 = vmatprep.subr.bf16.mxu0 0
    %1256 = vmatpush2.bf16.msra.mxu0 0
    %1257 = vmatprep.subr.bf16.mxu0 0
    %1258 = vmatpush2.bf16.msra.mxu0 0
    %1259 = vmatprep.subr.bf16.mxu0 0
    %1260 = vmatpush2.bf16.msra.mxu0 0
    %1261 = vmatprep.subr.bf16.mxu0 0
    %1262 = vmatpush2.bf16.msra.mxu0 0
    %1263 = vmatprep.subr.bf16.mxu0 0
    %1264 = vmatpush2.bf16.msra.mxu0 0
    %1265 = vmatprep.subr.bf16.mxu0 0
    %1266 = vmatpush2.bf16.msra.mxu0 0
    %1267 = vmatprep.subr.bf16.mxu0 0
    %1268 = vmatpush2.bf16.msra.mxu0 0
    %1269 = vmatprep.subr.bf16.mxu0 0
    %1270 = vmatpush2.bf16.msra.mxu0 0
    %1271 = vmatprep.mubr.bf16.mxu0 0
    %1272 = vmatmul.mubr.bf16.gmra.mxu0 %v1237
    %v1273 = vpop.f32.mrf.mxu0
    %v1274 = vadd.f32 0.0, %v1273
    %v1275 = vpop.f32.mrf.mxu0
    %v1276 = vpop.f32.mrf.mxu0
    %v1277 = vadd.f32 0.0, %v1276
    %v1278 = vpop.f32.mrf.mxu0
    %1279 = vdwg.mxu0
    %1280 = vmatprep.subr.bf16.mxu0 0
    %1281 = vmatpush1.bf16.msra.mxu0 0
    %1282 = vmatprep.subr.bf16.mxu0 0
    %1283 = vmatpush1.bf16.msra.mxu0 0
    %1284 = vmatprep.subr.bf16.mxu0 0
    %1285 = vmatpush1.bf16.msra.mxu0 0
    %1286 = vmatprep.subr.bf16.mxu0 0
    %1287 = vmatpush1.bf16.msra.mxu0 0
    %1288 = vmatprep.subr.bf16.mxu0 0
    %1289 = vmatpush1.bf16.msra.mxu0 %v149
    %1290 = vmatprep.subr.bf16.mxu0 0
    %1291 = vmatpush1.bf16.msra.mxu0 %v148
    %1292 = vmatprep.subr.bf16.mxu0 0
    %1293 = vmatpush1.bf16.msra.mxu0 %v147
    %1294 = vmatprep.subr.bf16.mxu0 0
    %1295 = vmatpush1.bf16.msra.mxu0 %v146
    %1296 = vmatprep.subr.bf16.mxu0 0
    %1297 = vmatpush2.bf16.msra.mxu0 0
    %1298 = vmatprep.subr.bf16.mxu0 0
    %1299 = vmatpush2.bf16.msra.mxu0 0
    %1300 = vmatprep.subr.bf16.mxu0 0
    %1301 = vmatpush2.bf16.msra.mxu0 0
    %1302 = vmatprep.subr.bf16.mxu0 0
    %1303 = vmatpush2.bf16.msra.mxu0 0
    %1304 = vmatprep.subr.bf16.mxu0 0
    %1305 = vmatpush2.bf16.msra.mxu0 0
    %1306 = vmatprep.subr.bf16.mxu0 0
    %1307 = vmatpush2.bf16.msra.mxu0 0
    %1308 = vmatprep.subr.bf16.mxu0 0
    %1309 = vmatpush2.bf16.msra.mxu0 0
    %1310 = vmatprep.subr.bf16.mxu0 0
    %1311 = vmatpush2.bf16.msra.mxu0 0
    %1312 = vmatprep.mubr.bf16.mxu0 0
    %1313 = vmatmul.mubr.bf16.gmra.mxu0 %v1237
    %v1314 = vpop.f32.mrf.mxu0
    %v1315 = vadd.f32 0.0, %v1314
    %v1316 = vpop.f32.mrf.mxu0
    %v1317 = vpop.f32.mrf.mxu0
    %v1318 = vadd.f32 0.0, %v1317
    %v1319 = vpop.f32.mrf.mxu0
    %1320 = vdwg.mxu0
    %v1321 = vrcp.pop %v1315
    %v1322 = vrcp.pop %v1318
    %v1323 = vmul.f32 %v1274, %v1321
    %v1324 = vmul.f32 %v1277, %v1322
    %s1325 = scalar_lea.vmem %s13, 16
    %v1326 = vld [vmem:[%s1325] sm:$0xf]
    %v1327 = vld [vmem:[%s1325 + $0x4] sm:$0xf]
    %v1328 = vld [vmem:[%s1325 + $0x8] sm:$0xf]
    %v1329 = vld [vmem:[%s1325 + $0xc] sm:$0xf]
    %v1330 = vpack.c.bf16 %v1324, %v1323
    %v1335 = vunpack.c.l.b16 %v1326
    %v1336 = vunpack.c.l.b16 %v1327
    %v1337 = vunpack.c.l.b16 %v1328
    %v1338 = vunpack.c.l.b16 %v1329
    %v1339 = vpack.c.b16 %v1336, %v1335
    %v1340 = vpack.c.b16 %v1338, %v1337
    %v1344 = vsel %vm91, %v1330, 0
    %1346 = vmatprep.subr.bf16.mxu0 0
    %1347 = vmatpush1.bf16.msra.mxu0 0
    %1348 = vmatprep.subr.bf16.mxu0 0
    %1349 = vmatpush1.bf16.msra.mxu0 0
    %1350 = vmatprep.subr.bf16.mxu0 0
    %1351 = vmatpush1.bf16.msra.mxu0 0
    %1352 = vmatprep.subr.bf16.mxu0 0
    %1353 = vmatpush1.bf16.msra.mxu0 0
    %1354 = vmatprep.subr.bf16.mxu0 0
    %1355 = vmatpush1.bf16.msra.mxu0 0
    %1356 = vmatprep.subr.bf16.mxu0 0
    %1357 = vmatpush1.bf16.msra.mxu0 0
    %1358 = vmatprep.subr.bf16.mxu0 0
    %1359 = vmatpush1.bf16.msra.mxu0 %v1340
    %1360 = vmatprep.subr.bf16.mxu0 0
    %1361 = vmatpush1.bf16.msra.mxu0 %v1339
    %1362 = vmatprep.subr.bf16.mxu0 0
    %1363 = vmatpush2.bf16.msra.mxu0 0
    %1364 = vmatprep.subr.bf16.mxu0 0
    %1365 = vmatpush2.bf16.msra.mxu0 0
    %1366 = vmatprep.subr.bf16.mxu0 0
    %1367 = vmatpush2.bf16.msra.mxu0 0
    %1368 = vmatprep.subr.bf16.mxu0 0
    %1369 = vmatpush2.bf16.msra.mxu0 0
    %1370 = vmatprep.subr.bf16.mxu0 0
    %1371 = vmatpush2.bf16.msra.mxu0 0
    %1372 = vmatprep.subr.bf16.mxu0 0
    %1373 = vmatpush2.bf16.msra.mxu0 0
    %1374 = vmatprep.subr.bf16.mxu0 0
    %1375 = vmatpush2.bf16.msra.mxu0 0
    %1376 = vmatprep.subr.bf16.mxu0 0
    %1377 = vmatpush2.bf16.msra.mxu0 0
    %1378 = vmatprep.mubr.bf16.mxu0 0
    %1379 = vmatmul.mubr.bf16.gmra.mxu0 %v1344
    %v1380 = vpop.f32.mrf.mxu0
    %v1381 = vadd.f32 0.0, %v1380
    %v1382 = vpop.f32.mrf.mxu0
    %v1383 = vpop.f32.mrf.mxu0
    %v1384 = vadd.f32 0.0, %v1383
    %v1385 = vpop.f32.mrf.mxu0
    %1386 = vdwg.mxu0
    %v1387 = vadd.f32 %v892, %v1381
    %v1388 = vadd.f32 %v893, %v1384
    %s1389 = scalar_lea.vmem %s14, 1
    %v1390 = vld [vmem:[%s1389] sm:$0x1]
    %v1392 = vlaneseq
    %v1393 = vshrl.u32 %v1392, 7
    %v1394 = vsub.s32 0, %v1393
    %v1395 = vrot.slane %v1390, %v1394
    %v1397 = vadd.f32 %v1387, %v1395
    %v1398 = vadd.f32 %v1388, %v1395
    %s1399 = scalar_lea.vmem %s15, 1
    %v1400 = vld [vmem:[%s1399] sm:$0x1]
    %s1401 = scalar_lea.vmem %s16, 1
    %v1402 = vld [vmem:[%s1401] sm:$0x1]
    %v1403 = vsel %vm91, %v1397, 0.0
    %1404 = vadd.xlane.f32.xlu0 %v1403
    %v1405 = vpop.xlane.xlu0 %1404
    %v1406 = vsel %vm91, %v1398, 0.0
    %1407 = vadd.xlane.f32.xlu0 %v1406
    %v1408 = vpop.xlane.xlu0 %1407
    %v1409 = vmul.f32 %v1405, %v158
    %v1410 = vmul.f32 %v1408, %v158
    %v1411 = vsub.f32 %v1397, %v1409
    %v1412 = vsub.f32 %v1398, %v1410
    %v1413 = vmul.f32 %v1411, %v1411
    %v1414 = vmul.f32 %v1412, %v1412
    %v1415 = vsel %vm91, %v1413, 0.0
    %1416 = vadd.xlane.f32.xlu0 %v1415
    %v1417 = vpop.xlane.xlu0 %1416
    %v1418 = vsel %vm91, %v1414, 0.0
    %1419 = vadd.xlane.f32.xlu0 %v1418
    %v1420 = vpop.xlane.xlu0 %1419
    %v1421 = vmul.f32 %v1417, %v158
    %v1422 = vmul.f32 %v1420, %v158
    %v1423 = vadd.f32 %v1421, 1e-05
    %v1424 = vadd.f32 %v1422, 1e-05
    %v1425 = vrsqrt.pop %v1423
    %v1426 = vrsqrt.pop %v1424
    %v1427 = vmul.f32 %v1411, %v1425
    %v1428 = vmul.f32 %v1412, %v1426
    %v1430 = vlaneseq
    %v1431 = vshrl.u32 %v1430, 7
    %v1432 = vsub.s32 0, %v1431
    %v1433 = vrot.slane %v1400, %v1432
    %v1435 = vmul.f32 %v1427, %v1433
    %v1436 = vmul.f32 %v1428, %v1433
    %v1438 = vlaneseq
    %v1439 = vshrl.u32 %v1438, 7
    %v1440 = vsub.s32 0, %v1439
    %v1441 = vrot.slane %v1402, %v1440
    %v1443 = vadd.f32 %v1435, %v1441
    %v1444 = vadd.f32 %v1436, %v1441
    %s1445 = scalar_lea.vmem %s17, 16
    %v1446 = vld [vmem:[%s1445] sm:$0xf]
    %v1447 = vld [vmem:[%s1445 + $0x4] sm:$0xf]
    %v1448 = vld [vmem:[%s1445 + $0x8] sm:$0xf]
    %v1449 = vld [vmem:[%s1445 + $0xc] sm:$0xf]
    %v1450 = vpack.c.bf16 %v1444, %v1443
    %s1451 = scalar_lea.vmem %s18, 1
    %v1452 = vld [vmem:[%s1451] sm:$0x1]
    %v1454 = vlaneseq
    %v1455 = vshrl.u32 %v1454, 7
    %v1456 = vsub.s32 0, %v1455
    %v1457 = vrot.slane %v1452, %v1456
    %v1463 = vunpack.c.l.b16 %v1446
    %v1464 = vunpack.c.l.b16 %v1447
    %v1465 = vunpack.c.l.b16 %v1448
    %v1466 = vunpack.c.l.b16 %v1449
    %v1467 = vpack.c.b16 %v1464, %v1463
    %v1468 = vpack.c.b16 %v1466, %v1465
    %v1472 = vsel %vm91, %v1450, 0
    %1474 = vmatprep.subr.bf16.mxu0 0
    %1475 = vmatpush1.bf16.msra.mxu0 0
    %1476 = vmatprep.subr.bf16.mxu0 0
    %1477 = vmatpush1.bf16.msra.mxu0 0
    %1478 = vmatprep.subr.bf16.mxu0 0
    %1479 = vmatpush1.bf16.msra.mxu0 0
    %1480 = vmatprep.subr.bf16.mxu0 0
    %1481 = vmatpush1.bf16.msra.mxu0 0
    %1482 = vmatprep.subr.bf16.mxu0 0
    %1483 = vmatpush1.bf16.msra.mxu0 0
    %1484 = vmatprep.subr.bf16.mxu0 0
    %1485 = vmatpush1.bf16.msra.mxu0 0
    %1486 = vmatprep.subr.bf16.mxu0 0
    %1487 = vmatpush1.bf16.msra.mxu0 %v1468
    %1488 = vmatprep.subr.bf16.mxu0 0
    %1489 = vmatpush1.bf16.msra.mxu0 %v1467
    %1490 = vmatprep.subr.bf16.mxu0 0
    %1491 = vmatpush2.bf16.msra.mxu0 0
    %1492 = vmatprep.subr.bf16.mxu0 0
    %1493 = vmatpush2.bf16.msra.mxu0 0
    %1494 = vmatprep.subr.bf16.mxu0 0
    %1495 = vmatpush2.bf16.msra.mxu0 0
    %1496 = vmatprep.subr.bf16.mxu0 0
    %1497 = vmatpush2.bf16.msra.mxu0 0
    %1498 = vmatprep.subr.bf16.mxu0 0
    %1499 = vmatpush2.bf16.msra.mxu0 0
    %1500 = vmatprep.subr.bf16.mxu0 0
    %1501 = vmatpush2.bf16.msra.mxu0 0
    %1502 = vmatprep.subr.bf16.mxu0 0
    %1503 = vmatpush2.bf16.msra.mxu0 0
    %1504 = vmatprep.subr.bf16.mxu0 0
    %1505 = vmatpush2.bf16.msra.mxu0 0
    %1506 = vmatprep.mubr.bf16.mxu0 0
    %1507 = vmatmul.mubr.bf16.gmra.mxu0 %v1472
    %v1508 = vpop.f32.mrf.mxu0
    %v1509 = vadd.f32 %v1457, %v1508
    %v1510 = vpop.f32.mrf.mxu0
    %v1511 = vpop.f32.mrf.mxu0
    %v1512 = vadd.f32 %v1457, %v1511
    %v1513 = vpop.f32.mrf.mxu0
    %1514 = vdwg.mxu0
    %v1515 = vmul.f32 %v1509, 0.5
    %v1516 = vmul.f32 %v1512, 0.5
    %v1517 = vmul.f32 %v1509, 0.044715
    %v1518 = vmul.f32 %v1512, 0.044715
    %v1519 = vmul.f32 %v1517, %v1509
    %v1520 = vmul.f32 %v1518, %v1512
    %v1521 = vmul.f32 %v1519, %v1509
    %v1522 = vmul.f32 %v1520, %v1512
    %v1523 = vadd.f32 %v1509, %v1521
    %v1524 = vadd.f32 %v1512, %v1522
    %v1525 = vmul.f32 %v1523, 0.7978846
    %v1526 = vmul.f32 %v1524, 0.7978846
    %v1527 = vtanh.pop %v1525
    %v1528 = vtanh.pop %v1526
    %v1529 = vadd.f32 %v1527, 1.0
    %v1530 = vadd.f32 %v1528, 1.0
    %v1531 = vmul.f32 %v1515, %v1529
    %v1532 = vmul.f32 %v1516, %v1530
    %s1533 = scalar_lea.vmem %s19, 64
    %v1534 = vld [vmem:[%s1533] sm:$0xf]
    %v1535 = vld [vmem:[%s1533 + $0x4] sm:$0xf]
    %v1536 = vld [vmem:[%s1533 + $0x8] sm:$0xf]
    %v1537 = vld [vmem:[%s1533 + $0xc] sm:$0xf]
    %v1538 = vld [vmem:[%s1533 + $0x10] sm:$0xf]
    %v1539 = vld [vmem:[%s1533 + $0x14] sm:$0xf]
    %v1540 = vld [vmem:[%s1533 + $0x18] sm:$0xf]
    %v1541 = vld [vmem:[%s1533 + $0x1c] sm:$0xf]
    %v1542 = vld [vmem:[%s1533 + $0x20] sm:$0xf]
    %v1543 = vld [vmem:[%s1533 + $0x24] sm:$0xf]
    %v1544 = vld [vmem:[%s1533 + $0x28] sm:$0xf]
    %v1545 = vld [vmem:[%s1533 + $0x2c] sm:$0xf]
    %v1546 = vld [vmem:[%s1533 + $0x30] sm:$0xf]
    %v1547 = vld [vmem:[%s1533 + $0x34] sm:$0xf]
    %v1548 = vld [vmem:[%s1533 + $0x38] sm:$0xf]
    %v1549 = vld [vmem:[%s1533 + $0x3c] sm:$0xf]
    %v1550 = vpack.c.bf16 %v1532, %v1531
    %v1567 = vunpack.c.l.b16 %v1534
    %v1568 = vunpack.c.l.b16 %v1535
    %v1569 = vunpack.c.l.b16 %v1536
    %v1570 = vunpack.c.l.b16 %v1537
    %v1571 = vunpack.c.l.b16 %v1538
    %v1572 = vunpack.c.l.b16 %v1539
    %v1573 = vunpack.c.l.b16 %v1540
    %v1574 = vunpack.c.l.b16 %v1541
    %v1575 = vunpack.c.l.b16 %v1542
    %v1576 = vunpack.c.l.b16 %v1543
    %v1577 = vunpack.c.l.b16 %v1544
    %v1578 = vunpack.c.l.b16 %v1545
    %v1579 = vunpack.c.l.b16 %v1546
    %v1580 = vunpack.c.l.b16 %v1547
    %v1581 = vunpack.c.l.b16 %v1548
    %v1582 = vunpack.c.l.b16 %v1549
    %v1583 = vpack.c.b16 %v1568, %v1567
    %v1584 = vpack.c.b16 %v1570, %v1569
    %v1585 = vpack.c.b16 %v1572, %v1571
    %v1586 = vpack.c.b16 %v1574, %v1573
    %v1587 = vpack.c.b16 %v1576, %v1575
    %v1588 = vpack.c.b16 %v1578, %v1577
    %v1589 = vpack.c.b16 %v1580, %v1579
    %v1590 = vpack.c.b16 %v1582, %v1581
    %1599 = vmatprep.subr.bf16.mxu0 0
    %1600 = vmatpush1.bf16.msra.mxu0 %v1590
    %1601 = vmatprep.subr.bf16.mxu0 0
    %1602 = vmatpush1.bf16.msra.mxu0 %v1589
    %1603 = vmatprep.subr.bf16.mxu0 0
    %1604 = vmatpush1.bf16.msra.mxu0 %v1588
    %1605 = vmatprep.subr.bf16.mxu0 0
    %1606 = vmatpush1.bf16.msra.mxu0 %v1587
    %1607 = vmatprep.subr.bf16.mxu0 0
    %1608 = vmatpush1.bf16.msra.mxu0 %v1586
    %1609 = vmatprep.subr.bf16.mxu0 0
    %1610 = vmatpush1.bf16.msra.mxu0 %v1585
    %1611 = vmatprep.subr.bf16.mxu0 0
    %1612 = vmatpush1.bf16.msra.mxu0 %v1584
    %1613 = vmatprep.subr.bf16.mxu0 0
    %1614 = vmatpush1.bf16.msra.mxu0 %v1583
    %1615 = vmatprep.subr.bf16.mxu0 0
    %1616 = vmatpush2.bf16.msra.mxu0 0
    %1617 = vmatprep.subr.bf16.mxu0 0
    %1618 = vmatpush2.bf16.msra.mxu0 0
    %1619 = vmatprep.subr.bf16.mxu0 0
    %1620 = vmatpush2.bf16.msra.mxu0 0
    %1621 = vmatprep.subr.bf16.mxu0 0
    %1622 = vmatpush2.bf16.msra.mxu0 0
    %1623 = vmatprep.subr.bf16.mxu0 0
    %1624 = vmatpush2.bf16.msra.mxu0 0
    %1625 = vmatprep.subr.bf16.mxu0 0
    %1626 = vmatpush2.bf16.msra.mxu0 0
    %1627 = vmatprep.subr.bf16.mxu0 0
    %1628 = vmatpush2.bf16.msra.mxu0 0
    %1629 = vmatprep.subr.bf16.mxu0 0
    %1630 = vmatpush2.bf16.msra.mxu0 0
    %1631 = vmatprep.mubr.bf16.mxu0 0
    %1632 = vmatmul.mubr.bf16.gmra.mxu0 %v1550
    %v1633 = vpop.f32.mrf.mxu0
    %v1634 = vadd.f32 0.0, %v1633
    %v1635 = vpop.f32.mrf.mxu0
    %v1636 = vpop.f32.mrf.mxu0
    %v1637 = vadd.f32 0.0, %v1636
    %v1638 = vpop.f32.mrf.mxu0
    %1639 = vdwg.mxu0
    %v1640 = vadd.f32 %v1397, %v1634
    %v1641 = vadd.f32 %v1398, %v1637
    %s1642 = scalar_lea.vmem %s20, 1
    %v1643 = vld [vmem:[%s1642] sm:$0x1]
    %v1645 = vlaneseq
    %v1646 = vshrl.u32 %v1645, 7
    %v1647 = vsub.s32 0, %v1646
    %v1648 = vrot.slane %v1643, %v1647
    %v1650 = vadd.f32 %v1640, %v1648
    %v1651 = vadd.f32 %v1641, %v1648
    %1652 = vst.msk [vmem:[#allocation2] sm:$0xff] %vm91, %v1650
    %1653 = vst.msk [vmem:[#allocation2 + $0x8] sm:$0xff] %vm91, %v1651
    // Predicated region
    $region86: #{vit_forward.1} parent=1 // pred_check
      _
    $region87: #{vit_forward.1} parent=1 // pred_check_branch
      %1655 = sbr.rel (0) target = $region89
    $region88: #{vit_forward.1} parent=1 // pred_region
      %s1657 = ssub.s32 256, 256
      %1658 = vsyncadd [#allocation3], %s1657
      %s1659 = sshll.u32 [#allocation2], 4
      %s1660 = int_to_ptr.vmem [resolvable:$true] %s1659
      %1665 = dma.vmem_to_hbm [thread:$0]  %s1660, 256, %s21, [#allocation3], 128, 128, 8
    $region89: #{vit_forward.1} parent=1 // pred_fallthru
      _
    // Predicated region
    $region90: #{vit_forward.1} parent=1 // pred_check
      _
    $region91: #{vit_forward.1} parent=1 // pred_check_branch
      %1667 = sbr.rel (0) target = $region93
    $region92: #{vit_forward.1} parent=1 // pred_region
      %1668 = dma.done [#allocation3], 256
    $region93: #{vit_forward.1} parent=1 // pred_fallthru
      _
    %1669 = vsyncpa [#allocation3], 1

</llo_original>
